<compile_context>
chip_gen: v7x
topology: tpu7x:2x2x1
jax: 0.10.0
libtpu: 0.0.40
codegen_flags: <defaults>
</compile_context>

<pallas_src>
import functools

import numpy as np

import jax
import jax.numpy as jnp
from jax import lax
from jax.experimental import pallas as pl
from jax.experimental.pallas import tpu as pltpu

EPS = 1e-5


# ------------------------------- Pallas kernels ------------------------------ #

def _stage1_kernel(x_ref, a1_ref, b1_ref, w1_ref, wsc_ref, fold_ref,
                   y1_ref, sc_ref, ssum_ref, ssq_ref,
                   *, nb, ho, stride, proj):
    """relu(bn1(x)) -> conv1(3x3, stride) + shortcut, with fused bn2 partial stats.

    x_ref holds nb images stacked along rows: (nb*H, W*Cin), lane-dense.
    The dx taps / column padding / column stride are folded into the banded weights
    (w1_ref[dy] has shape (W*Cin, Wo*Cout)); the dy taps are handled with pltpu.roll
    on the per-tap matmul outputs + per-image boundary masks (no halo scratch).
    """
    m = nb * ho                                   # output rows in this block
    a1 = a1_ref[...]
    b1 = b1_ref[...]

    # "Center" rows: input rows j*stride of each image (dy=1 tap and the shortcut).
    if stride == 1:
        xc = x_ref[...]
    else:
        xc = x_ref[pl.ds(0, m, stride=stride), :]               # strided ref read
    tc = jnp.maximum(xc * a1 + b1, 0.0)                         # bn1+relu in f32
    tcb = tc.astype(jnp.bfloat16)

    # dy = 1 tap initializes the accumulator (no zeros+add).
    acc = jnp.dot(tcb, w1_ref[1], preferred_element_type=jnp.float32)   # (m, Wo*Cout)

    # Shortcut: banded 1x1 conv; the identity case is a plain copy (no matmul).
    if proj:
        sc = jnp.dot(tcb, wsc_ref[...], preferred_element_type=jnp.float32)
        sc_ref[...] = sc.astype(sc_ref.dtype)
    else:
        sc_ref[...] = tcb

    # "Off-center" rows: input rows j*stride + 1 feed the dy=0 and dy=2 taps
    # (for stride 1 they coincide with the center rows).
    if stride == 1:
        tob = tcb
    else:
        xo = x_ref[pl.ds(1, m, stride=stride), :]
        tob = jnp.maximum(xo * a1 + b1, 0.0).astype(jnp.bfloat16)
    p0 = jnp.dot(tob, w1_ref[0], preferred_element_type=jnp.float32)
    p2 = jnp.dot(tob, w1_ref[2], preferred_element_type=jnp.float32)

    # Row (dy) combine: out[r] += p0[r-1] (mask first row of each image)
    #                   out[r] += p2[r+1] (stride 1: mask last row; stride 2: aligned).
    rim = lax.broadcasted_iota(jnp.int32, (m, 1), 0) % ho       # row index within image
    acc = acc + jnp.where(rim != 0, pltpu.roll(p0, 1, axis=0), 0.0)
    if stride == 1:
        acc = acc + jnp.where(rim != ho - 1, pltpu.roll(p2, m - 1, axis=0), 0.0)
    else:
        acc = acc + p2

    y1_ref[...] = acc.astype(y1_ref.dtype)

    # bn2 partial batch statistics: single fold matmul on [acc; acc*acc] (f32 path).
    st = jnp.dot(jnp.concatenate([acc, acc * acc], axis=0), fold_ref[...],
                 preferred_element_type=jnp.float32)            # (2m, Cout)
    ssum_ref[0] = jnp.sum(st[:m], axis=0, keepdims=True)
    ssq_ref[0] = jnp.sum(st[m:], axis=0, keepdims=True)


def _stage2_kernel(y1_ref, sc_ref, a2_ref, b2_ref, w2_ref, out_ref, *, nb, ho):
    """relu(bn2(y1)) -> conv2(3x3, stride 1) -> 0.5*conv2 + 0.5*shortcut."""
    m = nb * ho
    t = jnp.maximum(y1_ref[...].astype(jnp.float32) * a2_ref[...] + b2_ref[...], 0.0)
    tb = t.astype(jnp.bfloat16)

    acc = jnp.dot(tb, w2_ref[1], preferred_element_type=jnp.float32)
    p0 = jnp.dot(tb, w2_ref[0], preferred_element_type=jnp.float32)
    p2 = jnp.dot(tb, w2_ref[2], preferred_element_type=jnp.float32)

    rim = lax.broadcasted_iota(jnp.int32, (m, 1), 0) % ho
    acc = acc + jnp.where(rim != 0, pltpu.roll(p0, 1, axis=0), 0.0)
    acc = acc + jnp.where(rim != ho - 1, pltpu.roll(p2, m - 1, axis=0), 0.0)

    out_ref[...] = 0.5 * acc + 0.5 * sc_ref[...].astype(jnp.float32)


# ------------------------ host-side weight pre-packing ----------------------- #

def _banded_conv3(w, w_in, stride, dtype):
    """(3,3,Cin,Cout) HWIO -> (3, W*Cin, Wo*Cout) banded weights (numpy, host)."""
    kh, kw, cin, cout = w.shape
    wo = (w_in - 1) // stride + 1
    wb = np.zeros((kh, w_in * cin, wo * cout), np.float32)
    for dx in range(kw):
        for j in range(wo):
            src = j * stride + dx - 1
            if 0 <= src < w_in:
                wb[:, src * cin:(src + 1) * cin, j * cout:(j + 1) * cout] = w[:, dx]
    return jnp.asarray(wb, dtype=dtype)


def _banded_conv1(w, w_in, stride, dtype):
    """(Cin,Cout) -> (W*Cin, Wo*Cout) banded 1x1 weights with column stride folded in."""
    cin, cout = w.shape
    wo = (w_in - 1) // stride + 1
    wb = np.zeros((w_in * cin, wo * cout), np.float32)
    for j in range(wo):
        s = j * stride
        wb[s * cin:(s + 1) * cin, j * cout:(j + 1) * cout] = w
    return jnp.asarray(wb, dtype=dtype)


def prepack_params(params, w_img, stride):
    """Build banded weights / fold matrix ONCE per parameter set (host-side numpy).

    This keeps the ~100 tiny dynamic-update-slice ops out of the per-forward jit path
    (the #1 item of the performance review)."""
    cin, cout = params["conv1_w"].shape[2], params["conv1_w"].shape[3]
    wo = (w_img - 1) // stride + 1
    proj = (stride != 1) or (cin != cout)
    w1 = np.asarray(params["conv1_w"], np.float32)
    w2 = np.asarray(params["conv2_w"], np.float32)
    wsc = np.asarray(params["sc_w"], np.float32) if proj else np.eye(cin, dtype=np.float32)
    return {
        "w1b": _banded_conv3(w1, w_img, stride, jnp.bfloat16),
        "w2b": _banded_conv3(w2, wo, 1, jnp.bfloat16),
        "wscb": _banded_conv1(wsc, w_img, stride, jnp.bfloat16),
        "fold2": jnp.asarray(np.tile(np.eye(cout, dtype=np.float32), (wo, 1))),
    }


# ----------------------------- PreActBlock forward --------------------------- #

def _pick_nb(n, h, target_rows=256):
    """Images per grid step: largest divisor of N with NB*H <= target_rows (raises
    matmul M).  With realistic batch sizes this also leaves >=2 grid steps per core."""
    nb = 1
    for cand in range(1, n + 1):
        if n % cand == 0 and cand * h <= target_rows:
            nb = cand
    return nb


@functools.partial(jax.jit, static_argnames=("stride", "nb"))
def _preact_block_jit(params, packed, x_nchw, cut, *, stride, nb):
    x = jnp.transpose(x_nchw, (0, 2, 3, 1)).astype(jnp.float32)      # NCHW -> NHWC
    n, h, w, cin = x.shape
    cout = packed["fold2"].shape[1]
    ho = (h - 1) // stride + 1
    wo = (w - 1) // stride + 1
    g = n // nb
    proj = (stride != 1) or (cin != cout)

    k1 = w * cin                                                     # stage-1 K
    l1 = wo * cout                                                   # stage-1/2 lane width
    x2d = x.reshape(n * h, k1)                                       # stacked lane-dense rows

    # ---- bn1 batch statistics: plain XLA reduction (HBM-bound, no kernel) -------
    xc = x.reshape(-1, cin)
    mean1 = jnp.mean(xc, axis=0)
    var1 = jnp.mean(jnp.square(xc - mean1), axis=0)                  # biased, as torch
    a1 = params["bn1_gamma"] * lax.rsqrt(var1 + EPS)
    b1 = params["bn1_beta"] - mean1 * a1
    a1_t = jnp.tile(a1, w)[None, :]
    b1_t = jnp.tile(b1, w)[None, :]

    par = pltpu.CompilerParams(dimension_semantics=("parallel",))
    m1 = n * ho

    # ---- stage 1: relu(bn1) -> conv1(+stride) + shortcut + bn2 partial stats ----
    conv_rows = n * h if stride == 1 else 2 * m1
    cost1 = pl.CostEstimate(
        flops=2 * k1 * l1 * (conv_rows + m1 + (m1 if proj else 0)) + 2 * (2 * m1) * l1 * cout,
        transcendentals=0,
        bytes_accessed=n * h * k1 * 4 + 2 * m1 * l1 * 2 + (4 * k1 * l1) * 2 + l1 * cout * 4)
    y1, sc, s2, q2 = pl.pallas_call(
        functools.partial(_stage1_kernel, nb=nb, ho=ho, stride=stride, proj=proj),
        out_shape=(jax.ShapeDtypeStruct((n * ho, l1), jnp.bfloat16),
                   jax.ShapeDtypeStruct((n * ho, l1), jnp.bfloat16),
                   jax.ShapeDtypeStruct((g, 1, cout), jnp.float32),
                   jax.ShapeDtypeStruct((g, 1, cout), jnp.float32)),
        grid=(g,),
        in_specs=[pl.BlockSpec((nb * h, k1), lambda i: (i, 0)),
                  pl.BlockSpec((1, k1), lambda i: (0, 0)),
                  pl.BlockSpec((1, k1), lambda i: (0, 0)),
                  pl.BlockSpec((3, k1, l1), lambda i: (0, 0, 0)),
                  pl.BlockSpec((k1, l1), lambda i: (0, 0)),
                  pl.BlockSpec((l1, cout), lambda i: (0, 0))],
        out_specs=(pl.BlockSpec((nb * ho, l1), lambda i: (i, 0)),
                   pl.BlockSpec((nb * ho, l1), lambda i: (i, 0)),
                   pl.BlockSpec((1, 1, cout), lambda i: (i, 0, 0)),
                   pl.BlockSpec((1, 1, cout), lambda i: (i, 0, 0))),
        compiler_params=par,
        cost_estimate=cost1,
    )(x2d, a1_t, b1_t, packed["w1b"], packed["wscb"], packed["fold2"])

    # ---- bn2 affine from the fused partial statistics ---------------------------
    cnt2 = jnp.float32(n * ho * wo)
    mean2 = jnp.sum(s2, axis=(0, 1)) / cnt2
    var2 = jnp.sum(q2, axis=(0, 1)) / cnt2 - mean2 * mean2           # f32 stats path
    a2 = params["bn2_gamma"] * lax.rsqrt(var2 + EPS)
    b2 = params["bn2_beta"] - mean2 * a2
    a2_t = jnp.tile(a2, wo)[None, :]
    b2_t = jnp.tile(b2, wo)[None, :]

    # ---- stage 2: relu(bn2) -> conv2 -> 0.5*out + 0.5*shortcut -------------------
    cost2 = pl.CostEstimate(
        flops=2 * m1 * l1 * l1 * 3,
        transcendentals=0,
        bytes_accessed=2 * m1 * l1 * 2 + m1 * l1 * 4 + 3 * l1 * l1 * 2)
    out2d = pl.pallas_call(
        functools.partial(_stage2_kernel, nb=nb, ho=ho),
        out_shape=jax.ShapeDtypeStruct((n * ho, l1), jnp.float32),
        grid=(g,),
        in_specs=[pl.BlockSpec((nb * ho, l1), lambda i: (i, 0)),
                  pl.BlockSpec((nb * ho, l1), lambda i: (i, 0)),
                  pl.BlockSpec((1, l1), lambda i: (0, 0)),
                  pl.BlockSpec((1, l1), lambda i: (0, 0)),
                  pl.BlockSpec((3, l1, l1), lambda i: (0, 0, 0))],
        out_specs=pl.BlockSpec((nb * ho, l1), lambda i: (i, 0)),
        compiler_params=par,
        cost_estimate=cost2,
    )(y1, sc, a2_t, b2_t, packed["w2b"])

    out = out2d.reshape(n, ho, wo, cout).transpose(0, 3, 1, 2)       # back to NCHW
    # TODO(synk): BatchNorm running-mean/var buffer updates (training bookkeeping with
    # no effect on this forward's output) are not emitted.
    return out, cut


def preact_block_forward(params, packed, x_nchw, cut, stride=1, nb=None):
    """forward((x, cut)) -> (out, cut), matching the PyTorch module (training-mode BN)."""
    n, _, h, _ = x_nchw.shape
    assert stride in (1, 2) and h % stride == 0
    if nb is None:
        nb = _pick_nb(n, h)
    assert n % nb == 0
    return _preact_block_jit(params, packed, x_nchw, cut, stride=stride, nb=nb)


# --------------------------------- plain-JAX ref ------------------------------ #

def _ref_forward(params, x_nchw, cut, stride=1):
    x = jnp.transpose(x_nchw, (0, 2, 3, 1)).astype(jnp.float32)

    def bn_relu(x, g, b):
        mean = jnp.mean(x, axis=(0, 1, 2), keepdims=True)
        var = jnp.mean((x - mean) ** 2, axis=(0, 1, 2), keepdims=True)
        return jnp.maximum((x - mean) * lax.rsqrt(var + EPS) * g + b, 0.0)

    def conv(x, w, s, pad):
        return lax.conv_general_dilated(
            x, w, (s, s), pad, dimension_numbers=("NHWC", "HWIO", "NHWC"))

    in_planes = x.shape[-1]
    planes = params["conv1_w"].shape[-1]
    out = bn_relu(x, params["bn1_gamma"], params["bn1_beta"])
    if stride != 1 or in_planes != planes:
        shortcut = conv(out, params["sc_w"][None, None], stride, [(0, 0), (0, 0)])
    else:
        shortcut = out                                   # shortcut(out) = out (Sequential())
    out = conv(out, params["conv1_w"], stride, [(1, 1), (1, 1)])
    out = bn_relu(out, params["bn2_gamma"], params["bn2_beta"])
    out = conv(out, params["conv2_w"], 1, [(1, 1), (1, 1)])
    out = 0.5 * out + 0.5 * shortcut
    return jnp.transpose(out, (0, 3, 1, 2)), cut


# -------------------------------------- main ---------------------------------- #

def _make_params(key, in_planes, planes):
    ks = jax.random.split(key, 7)
    return {
        "bn1_gamma": 1.0 + 0.1 * jax.random.normal(ks[0], (in_planes,), jnp.float32),
        "bn1_beta": 0.1 * jax.random.normal(ks[1], (in_planes,), jnp.float32),
        "conv1_w": 0.1 * jax.random.normal(ks[2], (3, 3, in_planes, planes), jnp.float32),
        "bn2_gamma": 1.0 + 0.1 * jax.random.normal(ks[3], (planes,), jnp.float32),
        "bn2_beta": 0.1 * jax.random.normal(ks[4], (planes,), jnp.float32),
        "conv2_w": 0.1 * jax.random.normal(ks[5], (3, 3, planes, planes), jnp.float32),
        "sc_w": 0.1 * jax.random.normal(ks[6], (in_planes, planes), jnp.float32),
    }


if __name__ == "__main__":
    N, H, W = 2, 16, 16
    configs = [
        (4, 8, 1),   # projection (1x1) shortcut, stride 1  (primary config)
        (8, 8, 1),   # identity shortcut
        (4, 8, 2),   # projection shortcut, stride 2 (downsampling)
    ]

    key = jax.random.PRNGKey(0)
    for in_planes, planes, stride in configs:
        key, kp, kx, kc = jax.random.split(key, 4)
        params = _make_params(kp, in_planes, planes)
        x = jax.random.normal(kx, (N, in_planes, H, W), jnp.float32)   # NCHW, like torch
        cut = jax.random.normal(kc, (N, in_planes, H, W), jnp.float32)

        packed = prepack_params(params, W, stride)    # host-side, once per parameter set
        out, cut_out = preact_block_forward(params, packed, x, cut, stride=stride)
        out = jax.block_until_ready(out)

        ref_out, ref_cut = _ref_forward(params, x, cut, stride)
        ho = (H - 1) // stride + 1
        assert out.shape == (N, planes, ho, ho), out.shape
        max_err = float(jnp.max(jnp.abs(out - ref_out)))
        # bf16 MXU operands (f32 accumulation) -> looser tolerance than pure-f32.
        assert jnp.allclose(out, ref_out, rtol=5e-2, atol=5e-2), (stride, max_err)
        assert jnp.array_equal(cut_out, ref_cut)

    print("KERNEL_OK")
</pallas_src>

<mosaic_0001>
module attributes {stable_mosaic.version = 11 : i64} {
  func.func @_stage1_kernel(%arg0: i32, %arg1: memref<32x64xf32, #tpu.memory_space<vmem>>, %arg2: memref<1x64xf32, #tpu.memory_space<vmem>>, %arg3: memref<1x64xf32, #tpu.memory_space<vmem>>, %arg4: memref<3x64x128xbf16, #tpu.memory_space<vmem>>, %arg5: memref<64x128xbf16, #tpu.memory_space<vmem>>, %arg6: memref<128x8xf32, #tpu.memory_space<vmem>>, %arg7: memref<32x128xbf16, #tpu.memory_space<vmem>>, %arg8: memref<32x128xbf16, #tpu.memory_space<vmem>>, %arg9: memref<1x1x8xf32, #tpu.memory_space<vmem>>, %arg10: memref<1x1x8xf32, #tpu.memory_space<vmem>>) attributes {dimension_semantics = [#tpu.dimension_semantics<parallel>], iteration_bounds = array<i64: 1>, scalar_prefetch = 0 : i64, scratch_operands = 0 : i64, tpu.core_type = #tpu.core_type<tc>, window_params = [{transform_indices = @transform_0, window_bounds = array<i64: 32, 64>}, {pipeline_mode = #tpu.pipeline_mode<synchronous>, transform_indices = @transform_1, window_bounds = array<i64: 1, 64>}, {pipeline_mode = #tpu.pipeline_mode<synchronous>, transform_indices = @transform_2, window_bounds = array<i64: 1, 64>}, {pipeline_mode = #tpu.pipeline_mode<synchronous>, transform_indices = @transform_3, window_bounds = array<i64: 3, 64, 128>}, {pipeline_mode = #tpu.pipeline_mode<synchronous>, transform_indices = @transform_4, window_bounds = array<i64: 64, 128>}, {pipeline_mode = #tpu.pipeline_mode<synchronous>, transform_indices = @transform_5, window_bounds = array<i64: 128, 8>}, {transform_indices = @transform_6, window_bounds = array<i64: 32, 128>}, {transform_indices = @transform_7, window_bounds = array<i64: 32, 128>}, {transform_indices = @transform_8, window_bounds = array<i64: 1, 1, 8>}, {transform_indices = @transform_9, window_bounds = array<i64: 1, 1, 8>}]} {
    %c0 = arith.constant 0 : index
    %c0_0 = arith.constant 0 : index
    %0 = vector.load %arg2[%c0, %c0_0] : memref<1x64xf32, #tpu.memory_space<vmem>>, vector<1x64xf32>
    %c0_1 = arith.constant 0 : index
    %c0_2 = arith.constant 0 : index
    %1 = vector.load %arg3[%c0_1, %c0_2] : memref<1x64xf32, #tpu.memory_space<vmem>>, vector<1x64xf32>
    %c0_3 = arith.constant 0 : index
    %c0_4 = arith.constant 0 : index
    %2 = vector.load %arg1[%c0_3, %c0_4] : memref<32x64xf32, #tpu.memory_space<vmem>>, vector<32x64xf32>
    %3 = vector.broadcast %0 : vector<1x64xf32> to vector<32x64xf32>
    %4 = arith.mulf %2, %3 : vector<32x64xf32>
    %5 = vector.broadcast %1 : vector<1x64xf32> to vector<32x64xf32>
    %6 = arith.addf %4, %5 : vector<32x64xf32>
    %cst = arith.constant 0.000000e+00 : f32
    %7 = vector.broadcast %cst : f32 to vector<32x64xf32>
    %8 = arith.maximumf %6, %7 : vector<32x64xf32>
    %9 = arith.truncf %8 : vector<32x64xf32> to vector<32x64xbf16>
    %c1 = arith.constant 1 : index
    %c0_5 = arith.constant 0 : index
    %c0_6 = arith.constant 0 : index
    %10 = vector.load %arg4[%c1, %c0_5, %c0_6] : memref<3x64x128xbf16, #tpu.memory_space<vmem>>, vector<1x64x128xbf16>
    %11 = vector.shape_cast %10 : vector<1x64x128xbf16> to vector<64x128xbf16>
    %cst_7 = arith.constant dense<0.000000e+00> : vector<32x128xf32>
    %12 = tpu.matmul %9, %11, %cst_7 {dimension_numbers = #tpu.dot_dimension_numbers<[1], [0], [0], [1], [0, 0, 1, 1], [], []>} : vector<32x64xbf16>, vector<64x128xbf16>, vector<32x128xf32> -> vector<32x128xf32>
    %c0_8 = arith.constant 0 : index
    %c0_9 = arith.constant 0 : index
    %13 = vector.load %arg5[%c0_8, %c0_9] : memref<64x128xbf16, #tpu.memory_space<vmem>>, vector<64x128xbf16>
    %cst_10 = arith.constant dense<0.000000e+00> : vector<32x128xf32>
    %14 = tpu.matmul %9, %13, %cst_10 {dimension_numbers = #tpu.dot_dimension_numbers<[1], [0], [0], [1], [0, 0, 1, 1], [], []>} : vector<32x64xbf16>, vector<64x128xbf16>, vector<32x128xf32> -> vector<32x128xf32>
    %15 = arith.truncf %14 : vector<32x128xf32> to vector<32x128xbf16>
    %c0_11 = arith.constant 0 : index
    %c0_12 = arith.constant 0 : index
    %16 = vector.load %arg8[%c0_11, %c0_12] : memref<32x128xbf16, #tpu.memory_space<vmem>>, vector<32x128xbf16>
    tpu.vector_store %arg8[%c0_11, %c0_12], %15 {strides = array<i32>} : memref<32x128xbf16, #tpu.memory_space<vmem>>, vector<32x128xbf16>,
    %c0_13 = arith.constant 0 : index
    %c0_14 = arith.constant 0 : index
    %c0_15 = arith.constant 0 : index
    %17 = vector.load %arg4[%c0_13, %c0_14, %c0_15] : memref<3x64x128xbf16, #tpu.memory_space<vmem>>, vector<1x64x128xbf16>
    %18 = vector.shape_cast %17 : vector<1x64x128xbf16> to vector<64x128xbf16>
    %cst_16 = arith.constant dense<0.000000e+00> : vector<32x128xf32>
    %19 = tpu.matmul %9, %18, %cst_16 {dimension_numbers = #tpu.dot_dimension_numbers<[1], [0], [0], [1], [0, 0, 1, 1], [], []>} : vector<32x64xbf16>, vector<64x128xbf16>, vector<32x128xf32> -> vector<32x128xf32>
    %c2 = arith.constant 2 : index
    %c0_17 = arith.constant 0 : index
    %c0_18 = arith.constant 0 : index
    %20 = vector.load %arg4[%c2, %c0_17, %c0_18] : memref<3x64x128xbf16, #tpu.memory_space<vmem>>, vector<1x64x128xbf16>
    %21 = vector.shape_cast %20 : vector<1x64x128xbf16> to vector<64x128xbf16>
    %cst_19 = arith.constant dense<0.000000e+00> : vector<32x128xf32>
    %22 = tpu.matmul %9, %21, %cst_19 {dimension_numbers = #tpu.dot_dimension_numbers<[1], [0], [0], [1], [0, 0, 1, 1], [], []>} : vector<32x64xbf16>, vector<64x128xbf16>, vector<32x128xf32> -> vector<32x128xf32>
    %23 = tpu.iota {dimensions = array<i32: 0>} : vector<32x1xi32>
    %c16_i32 = arith.constant 16 : i32
    %c0_i32 = arith.constant 0 : i32
    %24 = arith.cmpi eq, %c16_i32, %c0_i32 : i32
    %c1_i32 = arith.constant 1 : i32
    %25 = arith.select %24, %c1_i32, %c16_i32 : i32
    %26 = vector.broadcast %25 : i32 to vector<32x1xi32>
    %27 = arith.remsi %23, %26 : vector<32x1xi32>
    %c0_i32_20 = arith.constant 0 : i32
    %28 = vector.broadcast %c0_i32_20 : i32 to vector<32x1xi32>
    %29 = arith.cmpi ne, %27, %28 : vector<32x1xi32>
    %c0_i32_21 = arith.constant 0 : i32
    %30 = vector.broadcast %c0_i32_21 : i32 to vector<32x1xi32>
    %31 = arith.cmpi slt, %27, %30 : vector<32x1xi32>
    %c0_i32_22 = arith.constant 0 : i32
    %32 = arith.cmpi slt, %25, %c0_i32_22 : i32
    %33 = vector.broadcast %32 : i1 to vector<32x1xi1>
    %34 = vector.broadcast %33 : vector<32x1xi1> to vector<32x1xi1>
    %35 = arith.xori %31, %34 : vector<32x1xi1>
    %36 = arith.andi %35, %29 : vector<32x1xi1>
    %37 = vector.broadcast %25 : i32 to vector<32x1xi32>
    %38 = arith.addi %27, %37 : vector<32x1xi32>
    %39 = arith.select %36, %38, %27 : vector<32x1xi1>, vector<32x1xi32>
    %c0_i32_23 = arith.constant 0 : i32
    %40 = vector.broadcast %c0_i32_23 : i32 to vector<32x1xi32>
    %41 = arith.cmpi ne, %39, %40 : vector<32x1xi32>
    %c1_i32_24 = arith.constant 1 : i32
    %42 = tpu.dynamic_rotate %19 by %c1_i32_24 dim 0 : vector<32x128xf32>, i32 -> vector<32x128xf32>
    %cst_25 = arith.constant 0.000000e+00 : f32
    %43 = vector.shape_cast %41 : vector<32x1xi1> to vector<32x1xi1>
    %44 = vector.broadcast %43 : vector<32x1xi1> to vector<32x128xi1>
    %45 = vector.broadcast %cst_25 : f32 to vector<32x128xf32>
    %46 = arith.select %44, %42, %45 : vector<32x128xi1>, vector<32x128xf32>
    %47 = arith.addf %12, %46 : vector<32x128xf32>
    %c15_i32 = arith.constant 15 : i32
    %48 = vector.broadcast %c15_i32 : i32 to vector<32x1xi32>
    %49 = arith.cmpi ne, %39, %48 : vector<32x1xi32>
    %c31_i32 = arith.constant 31 : i32
    %50 = tpu.dynamic_rotate %22 by %c31_i32 dim 0 : vector<32x128xf32>, i32 -> vector<32x128xf32>
    %cst_26 = arith.constant 0.000000e+00 : f32
    %51 = vector.shape_cast %49 : vector<32x1xi1> to vector<32x1xi1>
    %52 = vector.broadcast %51 : vector<32x1xi1> to vector<32x128xi1>
    %53 = vector.broadcast %cst_26 : f32 to vector<32x128xf32>
    %54 = arith.select %52, %50, %53 : vector<32x128xi1>, vector<32x128xf32>
    %55 = arith.addf %47, %54 : vector<32x128xf32>
    %56 = arith.truncf %55 : vector<32x128xf32> to vector<32x128xbf16>
    %c0_27 = arith.constant 0 : index
    %c0_28 = arith.constant 0 : index
    %57 = vector.load %arg7[%c0_27, %c0_28] : memref<32x128xbf16, #tpu.memory_space<vmem>>, vector<32x128xbf16>
    tpu.vector_store %arg7[%c0_27, %c0_28], %56 {strides = array<i32>} : memref<32x128xbf16, #tpu.memory_space<vmem>>, vector<32x128xbf16>,
    %58 = arith.mulf %55, %55 : vector<32x128xf32>
    %59 = tpu.concatenate %55, %58 in 0 : vector<32x128xf32>, vector<32x128xf32> -> vector<64x128xf32>
    %c0_29 = arith.constant 0 : index
    %c0_30 = arith.constant 0 : index
    %60 = vector.load %arg6[%c0_29, %c0_30] : memref<128x8xf32, #tpu.memory_space<vmem>>, vector<128x8xf32>
    %cst_31 = arith.constant dense<0.000000e+00> : vector<64x8xf32>
    %61 = tpu.matmul %59, %60, %cst_31 {dimension_numbers = #tpu.dot_dimension_numbers<[1], [0], [0], [1], [0, 0, 1, 1], [], []>} : vector<64x128xf32>, vector<128x8xf32>, vector<64x8xf32> -> vector<64x8xf32>
    %62 = vector.extract_strided_slice %61 {offsets = [0, 0], sizes = [32, 8], strides = [1, 1]} : vector<64x8xf32> to vector<32x8xf32>
    %cst_32 = arith.constant dense<0.000000e+00> : vector<8xf32>
    %63 = vector.multi_reduction <add>, %62, %cst_32 [0] : vector<32x8xf32> to vector<8xf32>
    %64 = vector.shape_cast %63 : vector<8xf32> to vector<1x8xf32>
    %c0_33 = arith.constant 0 : index
    %c0_34 = arith.constant 0 : index
    %c0_35 = arith.constant 0 : index
    %65 = vector.load %arg9[%c0_33, %c0_34, %c0_35] : memref<1x1x8xf32, #tpu.memory_space<vmem>>, vector<1x1x8xf32>
    %66 = vector.shape_cast %65 : vector<1x1x8xf32> to vector<1x8xf32>
    %67 = vector.shape_cast %64 : vector<1x8xf32> to vector<1x1x8xf32>
    tpu.vector_store %arg9[%c0_33, %c0_34, %c0_35], %67 {strides = array<i32>} : memref<1x1x8xf32, #tpu.memory_space<vmem>>, vector<1x1x8xf32>,
    %68 = vector.extract_strided_slice %61 {offsets = [32, 0], sizes = [32, 8], strides = [1, 1]} : vector<64x8xf32> to vector<32x8xf32>
    %cst_36 = arith.constant dense<0.000000e+00> : vector<8xf32>
    %69 = vector.multi_reduction <add>, %68, %cst_36 [0] : vector<32x8xf32> to vector<8xf32>
    %70 = vector.shape_cast %69 : vector<8xf32> to vector<1x8xf32>
    %c0_37 = arith.constant 0 : index
    %c0_38 = arith.constant 0 : index
    %c0_39 = arith.constant 0 : index
    %71 = vector.load %arg10[%c0_37, %c0_38, %c0_39] : memref<1x1x8xf32, #tpu.memory_space<vmem>>, vector<1x1x8xf32>
    %72 = vector.shape_cast %71 : vector<1x1x8xf32> to vector<1x8xf32>
    %73 = vector.shape_cast %70 : vector<1x8xf32> to vector<1x1x8xf32>
    tpu.vector_store %arg10[%c0_37, %c0_38, %c0_39], %73 {strides = array<i32>} : memref<1x1x8xf32, #tpu.memory_space<vmem>>, vector<1x1x8xf32>,
    return
  }
  func.func @transform_0(%arg0: i32) -> (i32, i32) {
    %c0_i32 = arith.constant 0 : i32
    %c0_i32_0 = arith.constant 0 : i32
    return %arg0, %c0_i32 : i32, i32
  }
  func.func @transform_1(%arg0: i32) -> (i32, i32) {
    %c0_i32 = arith.constant 0 : i32
    %c0_i32_0 = arith.constant 0 : i32
    %c0_i32_1 = arith.constant 0 : i32
    return %c0_i32, %c0_i32_0 : i32, i32
  }
  func.func @transform_2(%arg0: i32) -> (i32, i32) {
    %c0_i32 = arith.constant 0 : i32
    %c0_i32_0 = arith.constant 0 : i32
    %c0_i32_1 = arith.constant 0 : i32
    return %c0_i32, %c0_i32_0 : i32, i32
  }
  func.func @transform_3(%arg0: i32) -> (i32, i32, i32) {
    %c0_i32 = arith.constant 0 : i32
    %c0_i32_0 = arith.constant 0 : i32
    %c0_i32_1 = arith.constant 0 : i32
    %c0_i32_2 = arith.constant 0 : i32
    return %c0_i32, %c0_i32_0, %c0_i32_1 : i32, i32, i32
  }
  func.func @transform_4(%arg0: i32) -> (i32, i32) {
    %c0_i32 = arith.constant 0 : i32
    %c0_i32_0 = arith.constant 0 : i32
    %c0_i32_1 = arith.constant 0 : i32
    return %c0_i32, %c0_i32_0 : i32, i32
  }
  func.func @transform_5(%arg0: i32) -> (i32, i32) {
    %c0_i32 = arith.constant 0 : i32
    %c0_i32_0 = arith.constant 0 : i32
    %c0_i32_1 = arith.constant 0 : i32
    return %c0_i32, %c0_i32_0 : i32, i32
  }
  func.func @transform_6(%arg0: i32) -> (i32, i32) {
    %c0_i32 = arith.constant 0 : i32
    %c0_i32_0 = arith.constant 0 : i32
    return %arg0, %c0_i32 : i32, i32
  }
  func.func @transform_7(%arg0: i32) -> (i32, i32) {
    %c0_i32 = arith.constant 0 : i32
    %c0_i32_0 = arith.constant 0 : i32
    return %arg0, %c0_i32 : i32, i32
  }
  func.func @transform_8(%arg0: i32) -> (i32, i32, i32) {
    %c0_i32 = arith.constant 0 : i32
    %c0_i32_0 = arith.constant 0 : i32
    %c0_i32_1 = arith.constant 0 : i32
    return %arg0, %c0_i32, %c0_i32_0 : i32, i32, i32
  }
  func.func @transform_9(%arg0: i32) -> (i32, i32, i32) {
    %c0_i32 = arith.constant 0 : i32
    %c0_i32_0 = arith.constant 0 : i32
    %c0_i32_1 = arith.constant 0 : i32
    return %arg0, %c0_i32, %c0_i32_0 : i32, i32, i32
  }
}

module attributes {stable_mosaic.version = 11 : i64} {
  func.func @_stage2_kernel(%arg0: i32, %arg1: memref<32x128xbf16, #tpu.memory_space<vmem>>, %arg2: memref<32x128xbf16, #tpu.memory_space<vmem>>, %arg3: memref<1x128xf32, #tpu.memory_space<vmem>>, %arg4: memref<1x128xf32, #tpu.memory_space<vmem>>, %arg5: memref<3x128x128xbf16, #tpu.memory_space<vmem>>, %arg6: memref<32x128xf32, #tpu.memory_space<vmem>>) attributes {dimension_semantics = [#tpu.dimension_semantics<parallel>], iteration_bounds = array<i64: 1>, scalar_prefetch = 0 : i64, scratch_operands = 0 : i64, tpu.core_type = #tpu.core_type<tc>, window_params = [{transform_indices = @transform_0, window_bounds = array<i64: 32, 128>}, {transform_indices = @transform_1, window_bounds = array<i64: 32, 128>}, {pipeline_mode = #tpu.pipeline_mode<synchronous>, transform_indices = @transform_2, window_bounds = array<i64: 1, 128>}, {pipeline_mode = #tpu.pipeline_mode<synchronous>, transform_indices = @transform_3, window_bounds = array<i64: 1, 128>}, {pipeline_mode = #tpu.pipeline_mode<synchronous>, transform_indices = @transform_4, window_bounds = array<i64: 3, 128, 128>}, {transform_indices = @transform_5, window_bounds = array<i64: 32, 128>}]} {
    %c0 = arith.constant 0 : index
    %c0_0 = arith.constant 0 : index
    %0 = vector.load %arg1[%c0, %c0_0] : memref<32x128xbf16, #tpu.memory_space<vmem>>, vector<32x128xbf16>
    %1 = arith.extf %0 : vector<32x128xbf16> to vector<32x128xf32>
    %c0_1 = arith.constant 0 : index
    %c0_2 = arith.constant 0 : index
    %2 = vector.load %arg3[%c0_1, %c0_2] : memref<1x128xf32, #tpu.memory_space<vmem>>, vector<1x128xf32>
    %3 = vector.broadcast %2 : vector<1x128xf32> to vector<32x128xf32>
    %4 = arith.mulf %1, %3 : vector<32x128xf32>
    %c0_3 = arith.constant 0 : index
    %c0_4 = arith.constant 0 : index
    %5 = vector.load %arg4[%c0_3, %c0_4] : memref<1x128xf32, #tpu.memory_space<vmem>>, vector<1x128xf32>
    %6 = vector.broadcast %5 : vector<1x128xf32> to vector<32x128xf32>
    %7 = arith.addf %4, %6 : vector<32x128xf32>
    %cst = arith.constant 0.000000e+00 : f32
    %8 = vector.broadcast %cst : f32 to vector<32x128xf32>
    %9 = arith.maximumf %7, %8 : vector<32x128xf32>
    %10 = arith.truncf %9 : vector<32x128xf32> to vector<32x128xbf16>
    %c1 = arith.constant 1 : index
    %c0_5 = arith.constant 0 : index
    %c0_6 = arith.constant 0 : index
    %11 = vector.load %arg5[%c1, %c0_5, %c0_6] : memref<3x128x128xbf16, #tpu.memory_space<vmem>>, vector<1x128x128xbf16>
    %12 = vector.shape_cast %11 : vector<1x128x128xbf16> to vector<128x128xbf16>
    %cst_7 = arith.constant dense<0.000000e+00> : vector<32x128xf32>
    %13 = tpu.matmul %10, %12, %cst_7 {dimension_numbers = #tpu.dot_dimension_numbers<[1], [0], [0], [1], [0, 0, 1, 1], [], []>} : vector<32x128xbf16>, vector<128x128xbf16>, vector<32x128xf32> -> vector<32x128xf32>
    %c0_8 = arith.constant 0 : index
    %c0_9 = arith.constant 0 : index
    %c0_10 = arith.constant 0 : index
    %14 = vector.load %arg5[%c0_8, %c0_9, %c0_10] : memref<3x128x128xbf16, #tpu.memory_space<vmem>>, vector<1x128x128xbf16>
    %15 = vector.shape_cast %14 : vector<1x128x128xbf16> to vector<128x128xbf16>
    %cst_11 = arith.constant dense<0.000000e+00> : vector<32x128xf32>
    %16 = tpu.matmul %10, %15, %cst_11 {dimension_numbers = #tpu.dot_dimension_numbers<[1], [0], [0], [1], [0, 0, 1, 1], [], []>} : vector<32x128xbf16>, vector<128x128xbf16>, vector<32x128xf32> -> vector<32x128xf32>
    %c2 = arith.constant 2 : index
    %c0_12 = arith.constant 0 : index
    %c0_13 = arith.constant 0 : index
    %17 = vector.load %arg5[%c2, %c0_12, %c0_13] : memref<3x128x128xbf16, #tpu.memory_space<vmem>>, vector<1x128x128xbf16>
    %18 = vector.shape_cast %17 : vector<1x128x128xbf16> to vector<128x128xbf16>
    %cst_14 = arith.constant dense<0.000000e+00> : vector<32x128xf32>
    %19 = tpu.matmul %10, %18, %cst_14 {dimension_numbers = #tpu.dot_dimension_numbers<[1], [0], [0], [1], [0, 0, 1, 1], [], []>} : vector<32x128xbf16>, vector<128x128xbf16>, vector<32x128xf32> -> vector<32x128xf32>
    %20 = tpu.iota {dimensions = array<i32: 0>} : vector<32x1xi32>
    %c16_i32 = arith.constant 16 : i32
    %c0_i32 = arith.constant 0 : i32
    %21 = arith.cmpi eq, %c16_i32, %c0_i32 : i32
    %c1_i32 = arith.constant 1 : i32
    %22 = arith.select %21, %c1_i32, %c16_i32 : i32
    %23 = vector.broadcast %22 : i32 to vector<32x1xi32>
    %24 = arith.remsi %20, %23 : vector<32x1xi32>
    %c0_i32_15 = arith.constant 0 : i32
    %25 = vector.broadcast %c0_i32_15 : i32 to vector<32x1xi32>
    %26 = arith.cmpi ne, %24, %25 : vector<32x1xi32>
    %c0_i32_16 = arith.constant 0 : i32
    %27 = vector.broadcast %c0_i32_16 : i32 to vector<32x1xi32>
    %28 = arith.cmpi slt, %24, %27 : vector<32x1xi32>
    %c0_i32_17 = arith.constant 0 : i32
    %29 = arith.cmpi slt, %22, %c0_i32_17 : i32
    %30 = vector.broadcast %29 : i1 to vector<32x1xi1>
    %31 = vector.broadcast %30 : vector<32x1xi1> to vector<32x1xi1>
    %32 = arith.xori %28, %31 : vector<32x1xi1>
    %33 = arith.andi %32, %26 : vector<32x1xi1>
    %34 = vector.broadcast %22 : i32 to vector<32x1xi32>
    %35 = arith.addi %24, %34 : vector<32x1xi32>
    %36 = arith.select %33, %35, %24 : vector<32x1xi1>, vector<32x1xi32>
    %c0_i32_18 = arith.constant 0 : i32
    %37 = vector.broadcast %c0_i32_18 : i32 to vector<32x1xi32>
    %38 = arith.cmpi ne, %36, %37 : vector<32x1xi32>
    %c1_i32_19 = arith.constant 1 : i32
    %39 = tpu.dynamic_rotate %16 by %c1_i32_19 dim 0 : vector<32x128xf32>, i32 -> vector<32x128xf32>
    %cst_20 = arith.constant 0.000000e+00 : f32
    %40 = vector.shape_cast %38 : vector<32x1xi1> to vector<32x1xi1>
    %41 = vector.broadcast %40 : vector<32x1xi1> to vector<32x128xi1>
    %42 = vector.broadcast %cst_20 : f32 to vector<32x128xf32>
    %43 = arith.select %41, %39, %42 : vector<32x128xi1>, vector<32x128xf32>
    %44 = arith.addf %13, %43 : vector<32x128xf32>
    %c15_i32 = arith.constant 15 : i32
    %45 = vector.broadcast %c15_i32 : i32 to vector<32x1xi32>
    %46 = arith.cmpi ne, %36, %45 : vector<32x1xi32>
    %c31_i32 = arith.constant 31 : i32
    %47 = tpu.dynamic_rotate %19 by %c31_i32 dim 0 : vector<32x128xf32>, i32 -> vector<32x128xf32>
    %cst_21 = arith.constant 0.000000e+00 : f32
    %48 = vector.shape_cast %46 : vector<32x1xi1> to vector<32x1xi1>
    %49 = vector.broadcast %48 : vector<32x1xi1> to vector<32x128xi1>
    %50 = vector.broadcast %cst_21 : f32 to vector<32x128xf32>
    %51 = arith.select %49, %47, %50 : vector<32x128xi1>, vector<32x128xf32>
    %52 = arith.addf %44, %51 : vector<32x128xf32>
    %cst_22 = arith.constant 5.000000e-01 : f32
    %53 = vector.broadcast %cst_22 : f32 to vector<32x128xf32>
    %54 = arith.mulf %53, %52 : vector<32x128xf32>
    %c0_23 = arith.constant 0 : index
    %c0_24 = arith.constant 0 : index
    %55 = vector.load %arg2[%c0_23, %c0_24] : memref<32x128xbf16, #tpu.memory_space<vmem>>, vector<32x128xbf16>
    %56 = arith.extf %55 : vector<32x128xbf16> to vector<32x128xf32>
    %cst_25 = arith.constant 5.000000e-01 : f32
    %57 = vector.broadcast %cst_25 : f32 to vector<32x128xf32>
    %58 = arith.mulf %57, %56 : vector<32x128xf32>
    %59 = arith.addf %54, %58 : vector<32x128xf32>
    %c0_26 = arith.constant 0 : index
    %c0_27 = arith.constant 0 : index
    %60 = vector.load %arg6[%c0_26, %c0_27] : memref<32x128xf32, #tpu.memory_space<vmem>>, vector<32x128xf32>
    tpu.vector_store %arg6[%c0_26, %c0_27], %59 {strides = array<i32>} : memref<32x128xf32, #tpu.memory_space<vmem>>, vector<32x128xf32>,
    return
  }
  func.func @transform_0(%arg0: i32) -> (i32, i32) {
    %c0_i32 = arith.constant 0 : i32
    %c0_i32_0 = arith.constant 0 : i32
    return %arg0, %c0_i32 : i32, i32
  }
  func.func @transform_1(%arg0: i32) -> (i32, i32) {
    %c0_i32 = arith.constant 0 : i32
    %c0_i32_0 = arith.constant 0 : i32
    return %arg0, %c0_i32 : i32, i32
  }
  func.func @transform_2(%arg0: i32) -> (i32, i32) {
    %c0_i32 = arith.constant 0 : i32
    %c0_i32_0 = arith.constant 0 : i32
    %c0_i32_1 = arith.constant 0 : i32
    return %c0_i32, %c0_i32_0 : i32, i32
  }
  func.func @transform_3(%arg0: i32) -> (i32, i32) {
    %c0_i32 = arith.constant 0 : i32
    %c0_i32_0 = arith.constant 0 : i32
    %c0_i32_1 = arith.constant 0 : i32
    return %c0_i32, %c0_i32_0 : i32, i32
  }
  func.func @transform_4(%arg0: i32) -> (i32, i32, i32) {
    %c0_i32 = arith.constant 0 : i32
    %c0_i32_0 = arith.constant 0 : i32
    %c0_i32_1 = arith.constant 0 : i32
    %c0_i32_2 = arith.constant 0 : i32
    return %c0_i32, %c0_i32_0, %c0_i32_1 : i32, i32, i32
  }
  func.func @transform_5(%arg0: i32) -> (i32, i32) {
    %c0_i32 = arith.constant 0 : i32
    %c0_i32_0 = arith.constant 0 : i32
    return %arg0, %c0_i32 : i32, i32
  }
}

</mosaic_0001>

<llo_original>
// kernel: tile.23
$region0: #{tile.23}
  #allocation0 [shape = 's32[1]{0}', space=sflag, size = 0x4, scoped, tag = 'scoped memory for tile.23']
  %s0 = inlined_call_operand.vmem [shape: f32[4], index: 0, kind: input, shape index: {}]
  %s1 = inlined_call_operand.vmem [shape: f32[16,4], index: 1, kind: output, shape index: {}]
  // Predicated region
  $region2: #{tile.23} parent=0 // pred_check
    _
  $region3: #{tile.23} parent=0 // pred_check_branch
    %3 = sbr.rel (0) target = $region5
  $region4: #{tile.23} parent=0 // pred_region
    _
  $region5: #{tile.23} parent=0 // pred_fallthru
    _
  %v4 = vld [vmem:[%s0] ss:$0 sm:$0xff]
  %5 = vst [vmem:[%s1] sm:$0xff] %v4
  %s6 = scalar_lea.vmem %s1, 8
  %7 = vst [vmem:[%s6] sm:$0xff] %v4

// kernel: tile.24
$region0: #{tile.24}
  %s0 = inlined_call_operand.vmem [shape: f32[16,4], index: 0, kind: input, shape index: {}]
  %s1 = inlined_call_operand.vmem [shape: f32[1,64], index: 1, kind: output, shape index: {}]
  $region1: #{tile.24} parent=0
    #allocation0 [shape = 'u8[4096]{0}', space=vmem, size = 0x1000, scoped, tag = 'scoped mem for output reshape']
    %v2 = vld [vmem:[%s0] sm:$0x1]
    %vm3 = vcmask 31744
    %4 = vst.msk [vmem:[#allocation0] sm:$0x1] %vm3, %v2
    %s5 = scalar_lea.vmem %s0, 15
    %v6 = vld [vmem:[%s5] sm:$0x1]
    %7 = vrot.lane.b32.xlu0 %v6, 60
    %v8 = vpop.permute.xlu0 %7
    %vm9 = vcmask 523744
    %10 = vst.msk [vmem:[#allocation0] sm:$0x1] %vm9, %v8
    %s11 = scalar_lea.vmem %s0, 14
    %v12 = vld [vmem:[%s11] sm:$0x1]
    %13 = vrot.lane.b32.xlu0 %v12, 56
    %v14 = vpop.permute.xlu0 %13
    %vm15 = vcmask 490944
    %16 = vst.msk [vmem:[#allocation0] sm:$0x1] %vm15, %v14
    %s17 = scalar_lea.vmem %s0, 13
    %v18 = vld [vmem:[%s17] sm:$0x1]
    %19 = vrot.lane.b32.xlu0 %v18, 52
    %v20 = vpop.permute.xlu0 %19
    %vm21 = vcmask 458144
    %22 = vst.msk [vmem:[#allocation0] sm:$0x1] %vm21, %v20
    %s23 = scalar_lea.vmem %s0, 12
    %v24 = vld [vmem:[%s23] sm:$0x1]
    %25 = vrot.lane.b32.xlu0 %v24, 48
    %v26 = vpop.permute.xlu0 %25
    %vm27 = vcmask 425344
    %28 = vst.msk [vmem:[#allocation0] sm:$0x1] %vm27, %v26
    %s29 = scalar_lea.vmem %s0, 11
    %v30 = vld [vmem:[%s29] sm:$0x1]
    %31 = vrot.lane.b32.xlu0 %v30, 44
    %v32 = vpop.permute.xlu0 %31
    %vm33 = vcmask 392544
    %34 = vst.msk [vmem:[#allocation0] sm:$0x1] %vm33, %v32
    %s35 = scalar_lea.vmem %s0, 10
    %v36 = vld [vmem:[%s35] sm:$0x1]
    %37 = vrot.lane.b32.xlu0 %v36, 40
    %v38 = vpop.permute.xlu0 %37
    %vm39 = vcmask 359744
    %40 = vst.msk [vmem:[#allocation0] sm:$0x1] %vm39, %v38
    %s41 = scalar_lea.vmem %s0, 9
    %v42 = vld [vmem:[%s41] sm:$0x1]
    %43 = vrot.lane.b32.xlu0 %v42, 36
    %v44 = vpop.permute.xlu0 %43
    %vm45 = vcmask 326944
    %46 = vst.msk [vmem:[#allocation0] sm:$0x1] %vm45, %v44
    %s47 = scalar_lea.vmem %s0, 8
    %v48 = vld [vmem:[%s47] sm:$0x1]
    %49 = vrot.lane.b32.xlu0 %v48, 32
    %v50 = vpop.permute.xlu0 %49
    %vm51 = vcmask 294144
    %52 = vst.msk [vmem:[#allocation0] sm:$0x1] %vm51, %v50
    %s53 = scalar_lea.vmem %s0, 7
    %v54 = vld [vmem:[%s53] sm:$0x1]
    %55 = vrot.lane.b32.xlu0 %v54, 28
    %v56 = vpop.permute.xlu0 %55
    %vm57 = vcmask 261344
    %58 = vst.msk [vmem:[#allocation0] sm:$0x1] %vm57, %v56
    %s59 = scalar_lea.vmem %s0, 6
    %v60 = vld [vmem:[%s59] sm:$0x1]
    %61 = vrot.lane.b32.xlu0 %v60, 24
    %v62 = vpop.permute.xlu0 %61
    %vm63 = vcmask 228544
    %64 = vst.msk [vmem:[#allocation0] sm:$0x1] %vm63, %v62
    %s65 = scalar_lea.vmem %s0, 5
    %v66 = vld [vmem:[%s65] sm:$0x1]
    %67 = vrot.lane.b32.xlu0 %v66, 20
    %v68 = vpop.permute.xlu0 %67
    %vm69 = vcmask 195744
    %70 = vst.msk [vmem:[#allocation0] sm:$0x1] %vm69, %v68
    %s71 = scalar_lea.vmem %s0, 4
    %v72 = vld [vmem:[%s71] sm:$0x1]
    %73 = vrot.lane.b32.xlu0 %v72, 16
    %v74 = vpop.permute.xlu0 %73
    %vm75 = vcmask 162944
    %76 = vst.msk [vmem:[#allocation0] sm:$0x1] %vm75, %v74
    %s77 = scalar_lea.vmem %s0, 3
    %v78 = vld [vmem:[%s77] sm:$0x1]
    %79 = vrot.lane.b32.xlu0 %v78, 12
    %v80 = vpop.permute.xlu0 %79
    %vm81 = vcmask 130144
    %82 = vst.msk [vmem:[#allocation0] sm:$0x1] %vm81, %v80
    %s83 = scalar_lea.vmem %s0, 2
    %v84 = vld [vmem:[%s83] sm:$0x1]
    %85 = vrot.lane.b32.xlu0 %v84, 8
    %v86 = vpop.permute.xlu0 %85
    %vm87 = vcmask 97344
    %88 = vst.msk [vmem:[#allocation0] sm:$0x1] %vm87, %v86
    %s89 = scalar_lea.vmem %s0, 1
    %v90 = vld [vmem:[%s89] sm:$0x1]
    %91 = vrot.lane.b32.xlu0 %v90, 4
    %v92 = vpop.permute.xlu0 %91
    %vm93 = vcmask 64544
    %94 = vst.msk [vmem:[#allocation0] sm:$0x1] %vm93, %v92
    %s96 = sshllo.u32 0, 1
    %v98 = vld [vmem:[#allocation0] sm:%s96]
    %s99 = sshllo.u32 0, 1
    %100 = vst [vmem:[%s1] sm:%s99] %v98

// kernel: tile.33
$region0: #{tile.33}
  #allocation0 [shape = 's32[1]{0}', space=sflag, size = 0x4, scoped, tag = 'scoped memory for tile.33']
  %s0 = inlined_call_operand.vmem [shape: f32[8], index: 0, kind: input, shape index: {}]
  %s1 = inlined_call_operand.vmem [shape: f32[16,8], index: 1, kind: output, shape index: {}]
  // Predicated region
  $region2: #{tile.33} parent=0 // pred_check
    _
  $region3: #{tile.33} parent=0 // pred_check_branch
    %3 = sbr.rel (0) target = $region5
  $region4: #{tile.33} parent=0 // pred_region
    _
  $region5: #{tile.33} parent=0 // pred_fallthru
    _
  %v4 = vld [vmem:[%s0] ss:$0 sm:$0xff]
  %5 = vst [vmem:[%s1] sm:$0xff] %v4
  %s6 = scalar_lea.vmem %s1, 8
  %7 = vst [vmem:[%s6] sm:$0xff] %v4

// kernel: tile.34
$region0: #{tile.34}
  %s0 = inlined_call_operand.vmem [shape: f32[16,8], index: 0, kind: input, shape index: {}]
  %s1 = inlined_call_operand.vmem [shape: f32[1,128], index: 1, kind: output, shape index: {}]
  $region1: #{tile.34} parent=0
    #allocation0 [shape = 'u8[4096]{0}', space=vmem, size = 0x1000, scoped, tag = 'scoped mem for output reshape']
    %v2 = vld [vmem:[%s0] sm:$0x1]
    %vm3 = vcmask 64512
    %4 = vst.msk [vmem:[#allocation0] sm:$0x1] %vm3, %v2
    %s5 = scalar_lea.vmem %s0, 15
    %v6 = vld [vmem:[%s5] sm:$0x1]
    %7 = vrot.lane.b32.xlu0 %v6, 120
    %v8 = vpop.permute.xlu0 %7
    %vm9 = vcmask 1048512
    %10 = vst.msk [vmem:[#allocation0] sm:$0x1] %vm9, %v8
    %s11 = scalar_lea.vmem %s0, 14
    %v12 = vld [vmem:[%s11] sm:$0x1]
    %13 = vrot.lane.b32.xlu0 %v12, 112
    %v14 = vpop.permute.xlu0 %13
    %vm15 = vcmask 982912
    %16 = vst.msk [vmem:[#allocation0] sm:$0x1] %vm15, %v14
    %s17 = scalar_lea.vmem %s0, 13
    %v18 = vld [vmem:[%s17] sm:$0x1]
    %19 = vrot.lane.b32.xlu0 %v18, 104
    %v20 = vpop.permute.xlu0 %19
    %vm21 = vcmask 917312
    %22 = vst.msk [vmem:[#allocation0] sm:$0x1] %vm21, %v20
    %s23 = scalar_lea.vmem %s0, 12
    %v24 = vld [vmem:[%s23] sm:$0x1]
    %25 = vrot.lane.b32.xlu0 %v24, 96
    %v26 = vpop.permute.xlu0 %25
    %vm27 = vcmask 851712
    %28 = vst.msk [vmem:[#allocation0] sm:$0x1] %vm27, %v26
    %s29 = scalar_lea.vmem %s0, 11
    %v30 = vld [vmem:[%s29] sm:$0x1]
    %31 = vrot.lane.b32.xlu0 %v30, 88
    %v32 = vpop.permute.xlu0 %31
    %vm33 = vcmask 786112
    %34 = vst.msk [vmem:[#allocation0] sm:$0x1] %vm33, %v32
    %s35 = scalar_lea.vmem %s0, 10
    %v36 = vld [vmem:[%s35] sm:$0x1]
    %37 = vrot.lane.b32.xlu0 %v36, 80
    %v38 = vpop.permute.xlu0 %37
    %vm39 = vcmask 720512
    %40 = vst.msk [vmem:[#allocation0] sm:$0x1] %vm39, %v38
    %s41 = scalar_lea.vmem %s0, 9
    %v42 = vld [vmem:[%s41] sm:$0x1]
    %43 = vrot.lane.b32.xlu0 %v42, 72
    %v44 = vpop.permute.xlu0 %43
    %vm45 = vcmask 654912
    %46 = vst.msk [vmem:[#allocation0] sm:$0x1] %vm45, %v44
    %s47 = scalar_lea.vmem %s0, 8
    %v48 = vld [vmem:[%s47] sm:$0x1]
    %49 = vrot.lane.b32.xlu0 %v48, 64
    %v50 = vpop.permute.xlu0 %49
    %vm51 = vcmask 589312
    %52 = vst.msk [vmem:[#allocation0] sm:$0x1] %vm51, %v50
    %s53 = scalar_lea.vmem %s0, 7
    %v54 = vld [vmem:[%s53] sm:$0x1]
    %55 = vrot.lane.b32.xlu0 %v54, 56
    %v56 = vpop.permute.xlu0 %55
    %vm57 = vcmask 523712
    %58 = vst.msk [vmem:[#allocation0] sm:$0x1] %vm57, %v56
    %s59 = scalar_lea.vmem %s0, 6
    %v60 = vld [vmem:[%s59] sm:$0x1]
    %61 = vrot.lane.b32.xlu0 %v60, 48
    %v62 = vpop.permute.xlu0 %61
    %vm63 = vcmask 458112
    %64 = vst.msk [vmem:[#allocation0] sm:$0x1] %vm63, %v62
    %s65 = scalar_lea.vmem %s0, 5
    %v66 = vld [vmem:[%s65] sm:$0x1]
    %67 = vrot.lane.b32.xlu0 %v66, 40
    %v68 = vpop.permute.xlu0 %67
    %vm69 = vcmask 392512
    %70 = vst.msk [vmem:[#allocation0] sm:$0x1] %vm69, %v68
    %s71 = scalar_lea.vmem %s0, 4
    %v72 = vld [vmem:[%s71] sm:$0x1]
    %73 = vrot.lane.b32.xlu0 %v72, 32
    %v74 = vpop.permute.xlu0 %73
    %vm75 = vcmask 326912
    %76 = vst.msk [vmem:[#allocation0] sm:$0x1] %vm75, %v74
    %s77 = scalar_lea.vmem %s0, 3
    %v78 = vld [vmem:[%s77] sm:$0x1]
    %79 = vrot.lane.b32.xlu0 %v78, 24
    %v80 = vpop.permute.xlu0 %79
    %vm81 = vcmask 261312
    %82 = vst.msk [vmem:[#allocation0] sm:$0x1] %vm81, %v80
    %s83 = scalar_lea.vmem %s0, 2
    %v84 = vld [vmem:[%s83] sm:$0x1]
    %85 = vrot.lane.b32.xlu0 %v84, 16
    %v86 = vpop.permute.xlu0 %85
    %vm87 = vcmask 195712
    %88 = vst.msk [vmem:[#allocation0] sm:$0x1] %vm87, %v86
    %s89 = scalar_lea.vmem %s0, 1
    %v90 = vld [vmem:[%s89] sm:$0x1]
    %91 = vrot.lane.b32.xlu0 %v90, 8
    %v92 = vpop.permute.xlu0 %91
    %vm93 = vcmask 130112
    %94 = vst.msk [vmem:[#allocation0] sm:$0x1] %vm93, %v92
    %s96 = sshllo.u32 0, 1
    %v98 = vld [vmem:[#allocation0] sm:%s96]
    %s99 = sshllo.u32 0, 1
    %100 = vst [vmem:[%s1] sm:%s99] %v98

// kernel: _preact_block_jit.3
$region0: #{_preact_block_jit.3}
  #allocation0 [shape = 'u32[]', space=smem, size = 0x4, offset = 0x4, fixed_abs, tag = 'smem constant byte address 0x4 - core index']
  #allocation1 [shape = 'u32[144,128]{1,0:T(1,128)}', space=vmem, size = 0x12000, scoped, tag = 'internal scratch']
  %s0 = inlined_call_operand.vmem [shape: bf16[32,128], index: 0, kind: input, shape index: {}]
  %s1 = inlined_call_operand.vmem [shape: bf16[32,128], index: 1, kind: input, shape index: {}]
  %s2 = inlined_call_operand.vmem [shape: f32[1,128], index: 2, kind: input, shape index: {}]
  %s3 = inlined_call_operand.vmem [shape: f32[1,128], index: 3, kind: input, shape index: {}]
  %s4 = inlined_call_operand.vmem [shape: bf16[3,128,128], index: 4, kind: input, shape index: {}]
  %s5 = inlined_call_operand.vmem [shape: f32[32,128], index: 5, kind: output, shape index: {}]
  %s6 = sld [smem:[#allocation0]]
  $region30: #{_preact_block_jit.3} parent=0
    _
  %s8 = ssub.s32 1, %s6
  %s9 = scalar_select 0, %s8, %s6
  // Predicated region
  $region2: #{_preact_block_jit.3} parent=0 // pred_check
    _
  $region3: #{_preact_block_jit.3} parent=0 // pred_check_branch
    %11 = sbr.rel (0) target = $region5
  $region4: #{_preact_block_jit.3} parent=0 // pred_region
    _
  $region5: #{_preact_block_jit.3} parent=0 // pred_fallthru
    _
  // Predicated region
  $region6: #{_preact_block_jit.3} parent=0 // pred_check
    _
  $region7: #{_preact_block_jit.3} parent=0 // pred_check_branch
    %13 = sbr.rel (0) target = $region9
  $region8: #{_preact_block_jit.3} parent=0 // pred_region
    _
  $region9: #{_preact_block_jit.3} parent=0 // pred_fallthru
    _
  // Predicated region
  $region10: #{_preact_block_jit.3} parent=0 // pred_check
    _
  $region11: #{_preact_block_jit.3} parent=0 // pred_check_branch
    %15 = sbr.rel (0) target = $region13
  $region12: #{_preact_block_jit.3} parent=0 // pred_region
    _
  $region13: #{_preact_block_jit.3} parent=0 // pred_fallthru
    _
  // Predicated region
  $region14: #{_preact_block_jit.3} parent=0 // pred_check
    _
  $region15: #{_preact_block_jit.3} parent=0 // pred_check_branch
    %17 = sbr.rel (0) target = $region17
  $region16: #{_preact_block_jit.3} parent=0 // pred_region
    _
  $region17: #{_preact_block_jit.3} parent=0 // pred_fallthru
    _
  // Predicated region
  $region18: #{_preact_block_jit.3} parent=0 // pred_check
    _
  $region19: #{_preact_block_jit.3} parent=0 // pred_check_branch
    %19 = sbr.rel (0) target = $region21
  $region20: #{_preact_block_jit.3} parent=0 // pred_region
    _
  $region21: #{_preact_block_jit.3} parent=0 // pred_fallthru
    _
  %v21 = vld [vmem:[%s0] sm:$0xf]
  %v22 = vld [vmem:[%s0 + $0x4] sm:$0xf]
  %v23 = vld [vmem:[%s0 + $0x8] sm:$0xf]
  %v24 = vld [vmem:[%s0 + $0xc] sm:$0xf]
  %v25 = vunpack.c.l.bf16 %v21
  %v26 = vunpack.c.l.bf16 %v22
  %v27 = vunpack.c.l.bf16 %v23
  %v28 = vunpack.c.l.bf16 %v24
  %v29 = vld [vmem:[%s2] sm:$0x1]
  %v31 = vlaneseq
  %v32 = vshrl.u32 %v31, 7
  %v33 = vsub.s32 0, %v32
  %v34 = vrot.slane %v29, %v33
  %v36 = vmul.f32 %v25, %v34
  %v37 = vmul.f32 %v26, %v34
  %v38 = vmul.f32 %v27, %v34
  %v39 = vmul.f32 %v28, %v34
  %v40 = vld [vmem:[%s3] sm:$0x1]
  %v42 = vlaneseq
  %v43 = vshrl.u32 %v42, 7
  %v44 = vsub.s32 0, %v43
  %v45 = vrot.slane %v40, %v44
  %v47 = vadd.f32 %v36, %v45
  %v48 = vadd.f32 %v37, %v45
  %v49 = vadd.f32 %v38, %v45
  %v50 = vadd.f32 %v39, %v45
  %v51 = vmax.f32 %v47, 0.0
  %v52 = vmax.f32 %v48, 0.0
  %v53 = vmax.f32 %v49, 0.0
  %v54 = vmax.f32 %v50, 0.0
  %v55 = vpack.c.bf16 %v52, %v51
  %v56 = vpack.c.bf16 %v54, %v53
  %s57 = scalar_lea.vmem %s4, 64
  %v58 = vld [vmem:[%s57] sm:$0xf]
  %v59 = vld [vmem:[%s57 + $0x4] sm:$0xf]
  %v60 = vld [vmem:[%s57 + $0x8] sm:$0xf]
  %v61 = vld [vmem:[%s57 + $0xc] sm:$0xf]
  %v62 = vld [vmem:[%s57 + $0x10] sm:$0xf]
  %v63 = vld [vmem:[%s57 + $0x14] sm:$0xf]
  %v64 = vld [vmem:[%s57 + $0x18] sm:$0xf]
  %v65 = vld [vmem:[%s57 + $0x1c] sm:$0xf]
  %v66 = vld [vmem:[%s57 + $0x20] sm:$0xf]
  %v67 = vld [vmem:[%s57 + $0x24] sm:$0xf]
  %v68 = vld [vmem:[%s57 + $0x28] sm:$0xf]
  %v69 = vld [vmem:[%s57 + $0x2c] sm:$0xf]
  %v70 = vld [vmem:[%s57 + $0x30] sm:$0xf]
  %v71 = vld [vmem:[%s57 + $0x34] sm:$0xf]
  %v72 = vld [vmem:[%s57 + $0x38] sm:$0xf]
  %v73 = vld [vmem:[%s57 + $0x3c] sm:$0xf]
  %v74 = vld [vmem:[%s4] sm:$0xf]
  %v75 = vld [vmem:[%s4 + $0x4] sm:$0xf]
  %v76 = vld [vmem:[%s4 + $0x8] sm:$0xf]
  %v77 = vld [vmem:[%s4 + $0xc] sm:$0xf]
  %v78 = vld [vmem:[%s4 + $0x10] sm:$0xf]
  %v79 = vld [vmem:[%s4 + $0x14] sm:$0xf]
  %v80 = vld [vmem:[%s4 + $0x18] sm:$0xf]
  %v81 = vld [vmem:[%s4 + $0x1c] sm:$0xf]
  %v82 = vld [vmem:[%s4 + $0x20] sm:$0xf]
  %v83 = vld [vmem:[%s4 + $0x24] sm:$0xf]
  %v84 = vld [vmem:[%s4 + $0x28] sm:$0xf]
  %v85 = vld [vmem:[%s4 + $0x2c] sm:$0xf]
  %v86 = vld [vmem:[%s4 + $0x30] sm:$0xf]
  %v87 = vld [vmem:[%s4 + $0x34] sm:$0xf]
  %v88 = vld [vmem:[%s4 + $0x38] sm:$0xf]
  %v89 = vld [vmem:[%s4 + $0x3c] sm:$0xf]
  %v106 = vunpack.c.l.b16 %v74
  %v107 = vunpack.c.l.b16 %v75
  %v108 = vunpack.c.l.b16 %v76
  %v109 = vunpack.c.l.b16 %v77
  %v110 = vunpack.c.l.b16 %v78
  %v111 = vunpack.c.l.b16 %v79
  %v112 = vunpack.c.l.b16 %v80
  %v113 = vunpack.c.l.b16 %v81
  %v114 = vunpack.c.l.b16 %v82
  %v115 = vunpack.c.l.b16 %v83
  %v116 = vunpack.c.l.b16 %v84
  %v117 = vunpack.c.l.b16 %v85
  %v118 = vunpack.c.l.b16 %v86
  %v119 = vunpack.c.l.b16 %v87
  %v120 = vunpack.c.l.b16 %v88
  %v121 = vunpack.c.l.b16 %v89
  %v122 = vpack.c.b16 %v107, %v106
  %v123 = vpack.c.b16 %v109, %v108
  %v124 = vpack.c.b16 %v111, %v110
  %v125 = vpack.c.b16 %v113, %v112
  %v126 = vpack.c.b16 %v115, %v114
  %v127 = vpack.c.b16 %v117, %v116
  %v128 = vpack.c.b16 %v119, %v118
  %v129 = vpack.c.b16 %v121, %v120
  %138 = vmatprep.subr.bf16.mxu0 0
  %139 = vmatpush1.bf16.msra.mxu0 %v122
  %140 = vmatprep.subr.bf16.mxu0 0
  %141 = vmatpush1.bf16.msra.mxu0 %v123
  %142 = vmatprep.subr.bf16.mxu0 0
  %143 = vmatpush1.bf16.msra.mxu0 %v124
  %144 = vmatprep.subr.bf16.mxu0 0
  %145 = vmatpush1.bf16.msra.mxu0 %v125
  %146 = vmatprep.subr.bf16.mxu0 0
  %147 = vmatpush1.bf16.msra.mxu0 %v126
  %148 = vmatprep.subr.bf16.mxu0 0
  %149 = vmatpush1.bf16.msra.mxu0 %v127
  %150 = vmatprep.subr.bf16.mxu0 0
  %151 = vmatpush1.bf16.msra.mxu0 %v128
  %152 = vmatprep.subr.bf16.mxu0 0
  %153 = vmatpush1.bf16.msra.mxu0 %v129
  %154 = vmatprep.subr.bf16.mxu0 0
  %155 = vmatpush1.bf16.msra.mxu0 0
  %156 = vmatprep.subr.bf16.mxu0 0
  %157 = vmatpush1.bf16.msra.mxu0 0
  %158 = vmatprep.subr.bf16.mxu0 0
  %159 = vmatpush1.bf16.msra.mxu0 0
  %160 = vmatprep.subr.bf16.mxu0 0
  %161 = vmatpush1.bf16.msra.mxu0 0
  %162 = vmatprep.subr.bf16.mxu0 0
  %163 = vmatpush1.bf16.msra.mxu0 0
  %164 = vmatprep.subr.bf16.mxu0 0
  %165 = vmatpush1.bf16.msra.mxu0 0
  %166 = vmatprep.subr.bf16.mxu0 0
  %167 = vmatpush1.bf16.msra.mxu0 0
  %168 = vmatprep.subr.bf16.mxu0 0
  %169 = vmatpush1.bf16.msra.mxu0 0
  %170 = vmatprep.mubr.bf16.mxu0 0
  %171 = vmatmul.mubr.bf16.gmra.mrb[0].mxu0 %v55
  %v172 = vpop.f32.mrb[0].mxu0
  %v173 = vadd.f32 0.0, %v172
  %v174 = vpop.f32.mrb[0].mxu0
  %v175 = vpop.f32.mrb[0].mxu0
  %v176 = vadd.f32 0.0, %v175
  %v177 = vpop.f32.mrb[0].mxu0
  %178 = vmatprep.mubr.bf16.mxu0 0
  %179 = vmatmul.mubr.bf16.gmra.mrb[0].mxu0 %v56
  %v180 = vpop.f32.mrb[0].mxu0
  %v181 = vadd.f32 0.0, %v180
  %v182 = vpop.f32.mrb[0].mxu0
  %v183 = vpop.f32.mrb[0].mxu0
  %v184 = vadd.f32 0.0, %v183
  %v185 = vpop.f32.mrb[0].mxu0
  %186 = vdwg.mxu0
  %s187 = scalar_lea.vmem %s4, 128
  %v188 = vld [vmem:[%s187] sm:$0xf]
  %v189 = vld [vmem:[%s187 + $0x4] sm:$0xf]
  %v190 = vld [vmem:[%s187 + $0x8] sm:$0xf]
  %v191 = vld [vmem:[%s187 + $0xc] sm:$0xf]
  %v192 = vld [vmem:[%s187 + $0x10] sm:$0xf]
  %v193 = vld [vmem:[%s187 + $0x14] sm:$0xf]
  %v194 = vld [vmem:[%s187 + $0x18] sm:$0xf]
  %v195 = vld [vmem:[%s187 + $0x1c] sm:$0xf]
  %v196 = vld [vmem:[%s187 + $0x20] sm:$0xf]
  %v197 = vld [vmem:[%s187 + $0x24] sm:$0xf]
  %v198 = vld [vmem:[%s187 + $0x28] sm:$0xf]
  %v199 = vld [vmem:[%s187 + $0x2c] sm:$0xf]
  %v200 = vld [vmem:[%s187 + $0x30] sm:$0xf]
  %v201 = vld [vmem:[%s187 + $0x34] sm:$0xf]
  %v202 = vld [vmem:[%s187 + $0x38] sm:$0xf]
  %v203 = vld [vmem:[%s187 + $0x3c] sm:$0xf]
  %v220 = vunpack.c.l.b16 %v188
  %v221 = vunpack.c.l.b16 %v189
  %v222 = vunpack.c.l.b16 %v190
  %v223 = vunpack.c.l.b16 %v191
  %v224 = vunpack.c.l.b16 %v192
  %v225 = vunpack.c.l.b16 %v193
  %v226 = vunpack.c.l.b16 %v194
  %v227 = vunpack.c.l.b16 %v195
  %v228 = vunpack.c.l.b16 %v196
  %v229 = vunpack.c.l.b16 %v197
  %v230 = vunpack.c.l.b16 %v198
  %v231 = vunpack.c.l.b16 %v199
  %v232 = vunpack.c.l.b16 %v200
  %v233 = vunpack.c.l.b16 %v201
  %v234 = vunpack.c.l.b16 %v202
  %v235 = vunpack.c.l.b16 %v203
  %v236 = vpack.c.b16 %v221, %v220
  %v237 = vpack.c.b16 %v223, %v222
  %v238 = vpack.c.b16 %v225, %v224
  %v239 = vpack.c.b16 %v227, %v226
  %v240 = vpack.c.b16 %v229, %v228
  %v241 = vpack.c.b16 %v231, %v230
  %v242 = vpack.c.b16 %v233, %v232
  %v243 = vpack.c.b16 %v235, %v234
  %252 = vmatprep.subr.bf16.mxu0 0
  %253 = vmatpush1.bf16.msra.mxu0 %v236
  %254 = vmatprep.subr.bf16.mxu0 0
  %255 = vmatpush1.bf16.msra.mxu0 %v237
  %256 = vmatprep.subr.bf16.mxu0 0
  %257 = vmatpush1.bf16.msra.mxu0 %v238
  %258 = vmatprep.subr.bf16.mxu0 0
  %259 = vmatpush1.bf16.msra.mxu0 %v239
  %260 = vmatprep.subr.bf16.mxu0 0
  %261 = vmatpush1.bf16.msra.mxu0 %v240
  %262 = vmatprep.subr.bf16.mxu0 0
  %263 = vmatpush1.bf16.msra.mxu0 %v241
  %264 = vmatprep.subr.bf16.mxu0 0
  %265 = vmatpush1.bf16.msra.mxu0 %v242
  %266 = vmatprep.subr.bf16.mxu0 0
  %267 = vmatpush1.bf16.msra.mxu0 %v243
  %268 = vmatprep.subr.bf16.mxu0 0
  %269 = vmatpush1.bf16.msra.mxu0 0
  %270 = vmatprep.subr.bf16.mxu0 0
  %271 = vmatpush1.bf16.msra.mxu0 0
  %272 = vmatprep.subr.bf16.mxu0 0
  %273 = vmatpush1.bf16.msra.mxu0 0
  %274 = vmatprep.subr.bf16.mxu0 0
  %275 = vmatpush1.bf16.msra.mxu0 0
  %276 = vmatprep.subr.bf16.mxu0 0
  %277 = vmatpush1.bf16.msra.mxu0 0
  %278 = vmatprep.subr.bf16.mxu0 0
  %279 = vmatpush1.bf16.msra.mxu0 0
  %280 = vmatprep.subr.bf16.mxu0 0
  %281 = vmatpush1.bf16.msra.mxu0 0
  %282 = vmatprep.subr.bf16.mxu0 0
  %283 = vmatpush1.bf16.msra.mxu0 0
  %284 = vmatprep.mubr.bf16.mxu0 0
  %285 = vmatmul.mubr.bf16.gmra.mrb[0].mxu0 %v55
  %v286 = vpop.f32.mrb[0].mxu0
  %v287 = vadd.f32 0.0, %v286
  %v288 = vpop.f32.mrb[0].mxu0
  %v289 = vpop.f32.mrb[0].mxu0
  %v290 = vadd.f32 0.0, %v289
  %v291 = vpop.f32.mrb[0].mxu0
  %292 = vmatprep.mubr.bf16.mxu0 0
  %293 = vmatmul.mubr.bf16.gmra.mrb[0].mxu0 %v56
  %v294 = vpop.f32.mrb[0].mxu0
  %v295 = vadd.f32 0.0, %v294
  %v296 = vpop.f32.mrb[0].mxu0
  %v297 = vpop.f32.mrb[0].mxu0
  %v298 = vadd.f32 0.0, %v297
  %v299 = vpop.f32.mrb[0].mxu0
  %300 = vdwg.mxu0
  %v301 = vlaneseq
  %v302 = vshrl.u32 %v301, 7
  %v303 = vadd.s32 %v302, 8
  %v304 = vadd.s32 %v302, 16
  %v305 = vadd.s32 %v302, 24
  %vm306 = vcmp.lt.s32.totalorder %v302, 0
  %v307 = vsub.s32 0, %v302
  %v308 = vsel %vm306, %v307, %v302
  %v309 = vshrl.u32 %v308, 4
  %v310 = vand.u32 %v308, 15
  %v311 = vsub.s32 0, %v310
  %v312 = vsel %vm306, %v311, %v310
  %vm313 = vcmp.lt.s32.totalorder %v303, 0
  %v314 = vsub.s32 0, %v303
  %v315 = vsel %vm313, %v314, %v303
  %v316 = vshrl.u32 %v315, 4
  %v317 = vand.u32 %v315, 15
  %v318 = vsub.s32 0, %v317
  %v319 = vsel %vm313, %v318, %v317
  %vm320 = vcmp.lt.s32.totalorder %v304, 0
  %v321 = vsub.s32 0, %v304
  %v322 = vsel %vm320, %v321, %v304
  %v323 = vshrl.u32 %v322, 4
  %v324 = vand.u32 %v322, 15
  %v325 = vsub.s32 0, %v324
  %v326 = vsel %vm320, %v325, %v324
  %vm327 = vcmp.lt.s32.totalorder %v305, 0
  %v328 = vsub.s32 0, %v305
  %v329 = vsel %vm327, %v328, %v305
  %v330 = vshrl.u32 %v329, 4
  %v331 = vand.u32 %v329, 15
  %v332 = vsub.s32 0, %v331
  %v333 = vsel %vm327, %v332, %v331
  %vm334 = vcmp.ne.s32.totalorder %v312, 0
  %vm335 = vcmp.ne.s32.totalorder %v319, 0
  %vm336 = vcmp.ne.s32.totalorder %v326, 0
  %vm337 = vcmp.ne.s32.totalorder %v333, 0
  %vm338 = vcmp.lt.s32.totalorder %v312, 0
  %vm339 = vcmp.lt.s32.totalorder %v319, 0
  %vm340 = vcmp.lt.s32.totalorder %v326, 0
  %vm341 = vcmp.lt.s32.totalorder %v333, 0
  %vm342 = vmand %vm338, %vm334
  %vm343 = vmand %vm339, %vm335
  %vm344 = vmand %vm340, %vm336
  %vm345 = vmand %vm341, %vm337
  %v346 = vadd.s32 %v312, 16
  %v347 = vadd.s32 %v319, 16
  %v348 = vadd.s32 %v326, 16
  %v349 = vadd.s32 %v333, 16
  %v350 = vsel %vm342, %v346, %v312
  %v351 = vsel %vm343, %v347, %v319
  %v352 = vsel %vm344, %v348, %v326
  %v353 = vsel %vm345, %v349, %v333
  %vm354 = vcmp.ne.s32.totalorder %v350, 0
  %vm355 = vcmp.ne.s32.totalorder %v351, 0
  %vm356 = vcmp.ne.s32.totalorder %v352, 0
  %vm357 = vcmp.ne.s32.totalorder %v353, 0
  %v358 = vrot.slane %v173, 7
  %v359 = vrot.slane %v176, 7
  %v360 = vrot.slane %v181, 7
  %v361 = vrot.slane %v184, 7
  %vm362 = vcmp.lt.s32.totalorder %v302, 1
  %v363 = vsel %vm362, %v360, %v361
  %v364 = vsel %vm362, %v359, %v360
  %v365 = vsel %vm362, %v358, %v359
  %v366 = vsel %vm362, %v361, %v358
  %v367 = vsel %vm354, 1, 0
  %v368 = vsel %vm355, 1, 0
  %v369 = vsel %vm356, 1, 0
  %v370 = vsel %vm357, 1, 0
  %vm371 = vcmp.eq.s32.totalorder %v367, 1
  %vm372 = vcmp.eq.s32.totalorder %v368, 1
  %vm373 = vcmp.eq.s32.totalorder %v369, 1
  %vm374 = vcmp.eq.s32.totalorder %v370, 1
  %v375 = vsel %vm371, %v366, 0.0
  %v376 = vsel %vm372, %v365, 0.0
  %v377 = vsel %vm373, %v364, 0.0
  %v378 = vsel %vm374, %v363, 0.0
  %v395 = vunpack.c.l.b16 %v58
  %v396 = vunpack.c.l.b16 %v59
  %v397 = vunpack.c.l.b16 %v60
  %v398 = vunpack.c.l.b16 %v61
  %v399 = vunpack.c.l.b16 %v62
  %v400 = vunpack.c.l.b16 %v63
  %v401 = vunpack.c.l.b16 %v64
  %v402 = vunpack.c.l.b16 %v65
  %v403 = vunpack.c.l.b16 %v66
  %v404 = vunpack.c.l.b16 %v67
  %v405 = vunpack.c.l.b16 %v68
  %v406 = vunpack.c.l.b16 %v69
  %v407 = vunpack.c.l.b16 %v70
  %v408 = vunpack.c.l.b16 %v71
  %v409 = vunpack.c.l.b16 %v72
  %v410 = vunpack.c.l.b16 %v73
  %v411 = vpack.c.b16 %v396, %v395
  %v412 = vpack.c.b16 %v398, %v397
  %v413 = vpack.c.b16 %v400, %v399
  %v414 = vpack.c.b16 %v402, %v401
  %v415 = vpack.c.b16 %v404, %v403
  %v416 = vpack.c.b16 %v406, %v405
  %v417 = vpack.c.b16 %v408, %v407
  %v418 = vpack.c.b16 %v410, %v409
  %427 = vmatprep.subr.bf16.mxu0 0
  %428 = vmatpush1.bf16.msra.mxu0 %v411
  %429 = vmatprep.subr.bf16.mxu0 0
  %430 = vmatpush1.bf16.msra.mxu0 %v412
  %431 = vmatprep.subr.bf16.mxu0 0
  %432 = vmatpush1.bf16.msra.mxu0 %v413
  %433 = vmatprep.subr.bf16.mxu0 0
  %434 = vmatpush1.bf16.msra.mxu0 %v414
  %435 = vmatprep.subr.bf16.mxu0 0
  %436 = vmatpush1.bf16.msra.mxu0 %v415
  %437 = vmatprep.subr.bf16.mxu0 0
  %438 = vmatpush1.bf16.msra.mxu0 %v416
  %439 = vmatprep.subr.bf16.mxu0 0
  %440 = vmatpush1.bf16.msra.mxu0 %v417
  %441 = vmatprep.subr.bf16.mxu0 0
  %442 = vmatpush1.bf16.msra.mxu0 %v418
  %443 = vmatprep.subr.bf16.mxu0 0
  %444 = vmatpush1.bf16.msra.mxu0 0
  %445 = vmatprep.subr.bf16.mxu0 0
  %446 = vmatpush1.bf16.msra.mxu0 0
  %447 = vmatprep.subr.bf16.mxu0 0
  %448 = vmatpush1.bf16.msra.mxu0 0
  %449 = vmatprep.subr.bf16.mxu0 0
  %450 = vmatpush1.bf16.msra.mxu0 0
  %451 = vmatprep.subr.bf16.mxu0 0
  %452 = vmatpush1.bf16.msra.mxu0 0
  %453 = vmatprep.subr.bf16.mxu0 0
  %454 = vmatpush1.bf16.msra.mxu0 0
  %455 = vmatprep.subr.bf16.mxu0 0
  %456 = vmatpush1.bf16.msra.mxu0 0
  %457 = vmatprep.subr.bf16.mxu0 0
  %458 = vmatpush1.bf16.msra.mxu0 0
  %459 = vmatprep.mubr.bf16.mxu0 0
  %460 = vmatmul.mubr.bf16.gmra.mrb[0].mxu0 %v55
  %v461 = vpop.f32.mrb[0].mxu0
  %v462 = vadd.f32 %v375, %v461
  %v463 = vpop.f32.mrb[0].mxu0
  %v464 = vpop.f32.mrb[0].mxu0
  %v465 = vadd.f32 %v376, %v464
  %v466 = vpop.f32.mrb[0].mxu0
  %467 = vmatprep.mubr.bf16.mxu0 0
  %468 = vmatmul.mubr.bf16.gmra.mrb[0].mxu0 %v56
  %v469 = vpop.f32.mrb[0].mxu0
  %v470 = vadd.f32 %v377, %v469
  %v471 = vpop.f32.mrb[0].mxu0
  %v472 = vpop.f32.mrb[0].mxu0
  %v473 = vadd.f32 %v378, %v472
  %v474 = vpop.f32.mrb[0].mxu0
  %475 = vdwg.mxu0
  %vm476 = vcmp.ne.s32.totalorder %v350, 15
  %vm477 = vcmp.ne.s32.totalorder %v351, 15
  %vm478 = vcmp.ne.s32.totalorder %v352, 15
  %vm479 = vcmp.ne.s32.totalorder %v353, 15
  %v480 = vrot.slane %v287, 1
  %v481 = vrot.slane %v290, 1
  %v482 = vrot.slane %v295, 1
  %v483 = vrot.slane %v298, 1
  %vm484 = vcmp.lt.s32.totalorder %v302, 7
  %v485 = vsel %vm484, %v482, %v483
  %v486 = vsel %vm484, %v481, %v482
  %v487 = vsel %vm484, %v480, %v481
  %v488 = vsel %vm484, %v483, %v480
  %v489 = vsel %vm476, 1, 0
  %v490 = vsel %vm477, 1, 0
  %v491 = vsel %vm478, 1, 0
  %v492 = vsel %vm479, 1, 0
  %vm493 = vcmp.eq.s32.totalorder %v489, 1
  %vm494 = vcmp.eq.s32.totalorder %v490, 1
  %vm495 = vcmp.eq.s32.totalorder %v491, 1
  %vm496 = vcmp.eq.s32.totalorder %v492, 1
  %v497 = vsel %vm493, %v487, 0.0
  %v498 = vsel %vm494, %v486, 0.0
  %v499 = vsel %vm495, %v485, 0.0
  %v500 = vsel %vm496, %v488, 0.0
  %v501 = vadd.f32 %v462, %v497
  %v502 = vadd.f32 %v465, %v498
  %v503 = vadd.f32 %v470, %v499
  %v504 = vadd.f32 %v473, %v500
  %v505 = vmul.f32 %v501, 0.5
  %v506 = vmul.f32 %v502, 0.5
  %v507 = vmul.f32 %v503, 0.5
  %v508 = vmul.f32 %v504, 0.5
  %v509 = vld [vmem:[%s1] sm:$0xf]
  %v510 = vld [vmem:[%s1 + $0x4] sm:$0xf]
  %v511 = vld [vmem:[%s1 + $0x8] sm:$0xf]
  %v512 = vld [vmem:[%s1 + $0xc] sm:$0xf]
  %v513 = vunpack.c.l.bf16 %v509
  %v514 = vunpack.c.l.bf16 %v510
  %v515 = vunpack.c.l.bf16 %v511
  %v516 = vunpack.c.l.bf16 %v512
  %v517 = vmul.f32 %v513, 0.5
  %v518 = vmul.f32 %v514, 0.5
  %v519 = vmul.f32 %v515, 0.5
  %v520 = vmul.f32 %v516, 0.5
  %v521 = vadd.f32 %v505, %v517
  %v522 = vadd.f32 %v506, %v518
  %v523 = vadd.f32 %v507, %v519
  %v524 = vadd.f32 %v508, %v520
  %525 = vst [vmem:[%s5] sm:$0xff] %v521
  %526 = vst [vmem:[%s5 + $0x8] sm:$0xff] %v522
  %527 = vst [vmem:[%s5 + $0x10] sm:$0xff] %v523
  %528 = vst [vmem:[%s5 + $0x18] sm:$0xff] %v524
  // Predicated region
  $region22: #{_preact_block_jit.3} parent=0 // pred_check
    _
  $region23: #{_preact_block_jit.3} parent=0 // pred_check_branch
    %530 = sbr.rel (0) target = $region25
  $region24: #{_preact_block_jit.3} parent=0 // pred_region
    _
  $region25: #{_preact_block_jit.3} parent=0 // pred_fallthru
    _
  // Predicated region
  $region26: #{_preact_block_jit.3} parent=0 // pred_check
    _
  $region27: #{_preact_block_jit.3} parent=0 // pred_check_branch
    %532 = sbr.rel (0) target = $region29
  $region28: #{_preact_block_jit.3} parent=0 // pred_region
    _
  $region29: #{_preact_block_jit.3} parent=0 // pred_fallthru
    _

// kernel: _preact_block_jit.2
$region0: #{_preact_block_jit.2}
  #allocation0 [shape = 'u32[]', space=smem, size = 0x4, offset = 0x4, fixed_abs, tag = 'smem constant byte address 0x4 - core index']
  #allocation1 [shape = 'u32[144,128]{1,0:T(1,128)}', space=vmem, size = 0x12000, scoped, tag = 'internal scratch']
  %s0 = inlined_call_operand.vmem [shape: f32[32,64], index: 0, kind: input, shape index: {}]
  %s1 = inlined_call_operand.vmem [shape: f32[1,64], index: 1, kind: input, shape index: {}]
  %s2 = inlined_call_operand.vmem [shape: f32[1,64], index: 2, kind: input, shape index: {}]
  %s3 = inlined_call_operand.vmem [shape: bf16[3,64,128], index: 3, kind: input, shape index: {}]
  %s4 = inlined_call_operand.vmem [shape: bf16[64,128], index: 4, kind: input, shape index: {}]
  %s5 = inlined_call_operand.vmem [shape: f32[128,8], index: 5, kind: input, shape index: {}]
  %s6 = inlined_call_operand.vmem [shape: bf16[32,128], index: 6, kind: output, shape index: {0}]
  %s7 = inlined_call_operand.vmem [shape: bf16[32,128], index: 7, kind: output, shape index: {1}]
  %s8 = inlined_call_operand.vmem [shape: f32[1,1,8], index: 8, kind: output, shape index: {2}]
  %s9 = inlined_call_operand.vmem [shape: f32[1,1,8], index: 9, kind: output, shape index: {3}]
  %10 = xla_tuple %s6, %s7, %s8, %s9
  %s11 = sld [smem:[#allocation0]]
  $region58: #{_preact_block_jit.2} parent=0
    _
  %s13 = ssub.s32 1, %s11
  %s14 = scalar_select 0, %s13, %s11
  // Predicated region
  $region2: #{_preact_block_jit.2} parent=0 // pred_check
    _
  $region3: #{_preact_block_jit.2} parent=0 // pred_check_branch
    %16 = sbr.rel (0) target = $region5
  $region4: #{_preact_block_jit.2} parent=0 // pred_region
    _
  $region5: #{_preact_block_jit.2} parent=0 // pred_fallthru
    _
  // Predicated region
  $region6: #{_preact_block_jit.2} parent=0 // pred_check
    _
  $region7: #{_preact_block_jit.2} parent=0 // pred_check_branch
    %18 = sbr.rel (0) target = $region9
  $region8: #{_preact_block_jit.2} parent=0 // pred_region
    _
  $region9: #{_preact_block_jit.2} parent=0 // pred_fallthru
    _
  // Predicated region
  $region10: #{_preact_block_jit.2} parent=0 // pred_check
    _
  $region11: #{_preact_block_jit.2} parent=0 // pred_check_branch
    %20 = sbr.rel (0) target = $region13
  $region12: #{_preact_block_jit.2} parent=0 // pred_region
    _
  $region13: #{_preact_block_jit.2} parent=0 // pred_fallthru
    _
  // Predicated region
  $region14: #{_preact_block_jit.2} parent=0 // pred_check
    _
  $region15: #{_preact_block_jit.2} parent=0 // pred_check_branch
    %22 = sbr.rel (0) target = $region17
  $region16: #{_preact_block_jit.2} parent=0 // pred_region
    _
  $region17: #{_preact_block_jit.2} parent=0 // pred_fallthru
    _
  // Predicated region
  $region18: #{_preact_block_jit.2} parent=0 // pred_check
    _
  $region19: #{_preact_block_jit.2} parent=0 // pred_check_branch
    %24 = sbr.rel (0) target = $region21
  $region20: #{_preact_block_jit.2} parent=0 // pred_region
    _
  $region21: #{_preact_block_jit.2} parent=0 // pred_fallthru
    _
  // Predicated region
  $region22: #{_preact_block_jit.2} parent=0 // pred_check
    _
  $region23: #{_preact_block_jit.2} parent=0 // pred_check_branch
    %26 = sbr.rel (0) target = $region25
  $region24: #{_preact_block_jit.2} parent=0 // pred_region
    _
  $region25: #{_preact_block_jit.2} parent=0 // pred_fallthru
    _
  %v28 = vld [vmem:[%s1] sm:$0x1]
  %v29 = vld [vmem:[%s2] sm:$0x1]
  %v30 = vld [vmem:[%s0] sm:$0xff]
  %v31 = vld [vmem:[%s0 + $0x8] sm:$0xff]
  %v32 = vld [vmem:[%s0 + $0x10] sm:$0xff]
  %v33 = vld [vmem:[%s0 + $0x18] sm:$0xff]
  %v35 = vlaneseq
  %v36 = vshrl.u32 %v35, 7
  %v37 = vsub.s32 0, %v36
  %v38 = vrot.slane %v28, %v37
  %v40 = vmul.f32 %v30, %v38
  %v41 = vmul.f32 %v31, %v38
  %v42 = vmul.f32 %v32, %v38
  %v43 = vmul.f32 %v33, %v38
  %v45 = vlaneseq
  %v46 = vshrl.u32 %v45, 7
  %v47 = vsub.s32 0, %v46
  %v48 = vrot.slane %v29, %v47
  %v50 = vadd.f32 %v40, %v48
  %v51 = vadd.f32 %v41, %v48
  %v52 = vadd.f32 %v42, %v48
  %v53 = vadd.f32 %v43, %v48
  %v54 = vmax.f32 %v50, 0.0
  %v55 = vmax.f32 %v51, 0.0
  %v56 = vmax.f32 %v52, 0.0
  %v57 = vmax.f32 %v53, 0.0
  %v58 = vpack.c.bf16 %v55, %v54
  %v59 = vpack.c.bf16 %v57, %v56
  %s60 = scalar_lea.vmem %s3, 32
  %v61 = vld [vmem:[%s60] sm:$0xf]
  %v62 = vld [vmem:[%s60 + $0x4] sm:$0xf]
  %v63 = vld [vmem:[%s60 + $0x8] sm:$0xf]
  %v64 = vld [vmem:[%s60 + $0xc] sm:$0xf]
  %v65 = vld [vmem:[%s60 + $0x10] sm:$0xf]
  %v66 = vld [vmem:[%s60 + $0x14] sm:$0xf]
  %v67 = vld [vmem:[%s60 + $0x18] sm:$0xf]
  %v68 = vld [vmem:[%s60 + $0x1c] sm:$0xf]
  %v69 = vld [vmem:[%s4] sm:$0xf]
  %v70 = vld [vmem:[%s4 + $0x4] sm:$0xf]
  %v71 = vld [vmem:[%s4 + $0x8] sm:$0xf]
  %v72 = vld [vmem:[%s4 + $0xc] sm:$0xf]
  %v73 = vld [vmem:[%s4 + $0x10] sm:$0xf]
  %v74 = vld [vmem:[%s4 + $0x14] sm:$0xf]
  %v75 = vld [vmem:[%s4 + $0x18] sm:$0xf]
  %v76 = vld [vmem:[%s4 + $0x1c] sm:$0xf]
  %v85 = vunpack.c.l.b16 %v69
  %v86 = vunpack.c.l.b16 %v70
  %v87 = vunpack.c.l.b16 %v71
  %v88 = vunpack.c.l.b16 %v72
  %v89 = vunpack.c.l.b16 %v73
  %v90 = vunpack.c.l.b16 %v74
  %v91 = vunpack.c.l.b16 %v75
  %v92 = vunpack.c.l.b16 %v76
  %v93 = vpack.c.b16 %v86, %v85
  %v94 = vpack.c.b16 %v88, %v87
  %v95 = vpack.c.b16 %v90, %v89
  %v96 = vpack.c.b16 %v92, %v91
  %vm101 = vcmask 523264
  %v103 = vsel %vm101, %v58, 0
  %v106 = vsel %vm101, %v59, 0
  %108 = vmatprep.subr.bf16.mxu0 0
  %109 = vmatpush1.bf16.msra.mxu0 %v93
  %110 = vmatprep.subr.bf16.mxu0 0
  %111 = vmatpush1.bf16.msra.mxu0 %v94
  %112 = vmatprep.subr.bf16.mxu0 0
  %113 = vmatpush1.bf16.msra.mxu0 %v95
  %114 = vmatprep.subr.bf16.mxu0 0
  %115 = vmatpush1.bf16.msra.mxu0 %v96
  %116 = vmatprep.subr.bf16.mxu0 0
  %117 = vmatpush1.bf16.msra.mxu0 0
  %118 = vmatprep.subr.bf16.mxu0 0
  %119 = vmatpush1.bf16.msra.mxu0 0
  %120 = vmatprep.subr.bf16.mxu0 0
  %121 = vmatpush1.bf16.msra.mxu0 0
  %122 = vmatprep.subr.bf16.mxu0 0
  %123 = vmatpush1.bf16.msra.mxu0 0
  %124 = vmatprep.subr.bf16.mxu0 0
  %125 = vmatpush1.bf16.msra.mxu0 0
  %126 = vmatprep.subr.bf16.mxu0 0
  %127 = vmatpush1.bf16.msra.mxu0 0
  %128 = vmatprep.subr.bf16.mxu0 0
  %129 = vmatpush1.bf16.msra.mxu0 0
  %130 = vmatprep.subr.bf16.mxu0 0
  %131 = vmatpush1.bf16.msra.mxu0 0
  %132 = vmatprep.subr.bf16.mxu0 0
  %133 = vmatpush1.bf16.msra.mxu0 0
  %134 = vmatprep.subr.bf16.mxu0 0
  %135 = vmatpush1.bf16.msra.mxu0 0
  %136 = vmatprep.subr.bf16.mxu0 0
  %137 = vmatpush1.bf16.msra.mxu0 0
  %138 = vmatprep.subr.bf16.mxu0 0
  %139 = vmatpush1.bf16.msra.mxu0 0
  %140 = vmatprep.mubr.bf16.mxu0 0
  %141 = vmatmul.mubr.bf16.gmra.mrb[0].mxu0 %v103
  %v142 = vpop.f32.mrb[0].mxu0
  %v143 = vadd.f32 0.0, %v142
  %v144 = vpop.f32.mrb[0].mxu0
  %v145 = vpop.f32.mrb[0].mxu0
  %v146 = vadd.f32 0.0, %v145
  %v147 = vpop.f32.mrb[0].mxu0
  %148 = vmatprep.mubr.bf16.mxu0 0
  %149 = vmatmul.mubr.bf16.gmra.mrb[0].mxu0 %v106
  %v150 = vpop.f32.mrb[0].mxu0
  %v151 = vadd.f32 0.0, %v150
  %v152 = vpop.f32.mrb[0].mxu0
  %v153 = vpop.f32.mrb[0].mxu0
  %v154 = vadd.f32 0.0, %v153
  %v155 = vpop.f32.mrb[0].mxu0
  %156 = vdwg.mxu0
  %v157 = vpack.c.bf16 %v146, %v143
  %v158 = vpack.c.bf16 %v154, %v151
  %v161 = vunpack.c.l.b16 %v157
  %v162 = vunpack.c.h.b16 %v157
  %v163 = vunpack.c.l.b16 %v158
  %v164 = vunpack.c.h.b16 %v158
  %v165 = vpack.c.b16 %v161, %v161
  %v166 = vpack.c.b16 %v162, %v162
  %v167 = vpack.c.b16 %v163, %v163
  %v168 = vpack.c.b16 %v164, %v164
  %173 = vst [vmem:[%s7] sm:$0xf] %v165
  %174 = vst [vmem:[%s7 + $0x4] sm:$0xf] %v166
  %175 = vst [vmem:[%s7 + $0x8] sm:$0xf] %v167
  %176 = vst [vmem:[%s7 + $0xc] sm:$0xf] %v168
  %v177 = vld [vmem:[%s3] sm:$0xf]
  %v178 = vld [vmem:[%s3 + $0x4] sm:$0xf]
  %v179 = vld [vmem:[%s3 + $0x8] sm:$0xf]
  %v180 = vld [vmem:[%s3 + $0xc] sm:$0xf]
  %v181 = vld [vmem:[%s3 + $0x10] sm:$0xf]
  %v182 = vld [vmem:[%s3 + $0x14] sm:$0xf]
  %v183 = vld [vmem:[%s3 + $0x18] sm:$0xf]
  %v184 = vld [vmem:[%s3 + $0x1c] sm:$0xf]
  %v193 = vunpack.c.l.b16 %v177
  %v194 = vunpack.c.l.b16 %v178
  %v195 = vunpack.c.l.b16 %v179
  %v196 = vunpack.c.l.b16 %v180
  %v197 = vunpack.c.l.b16 %v181
  %v198 = vunpack.c.l.b16 %v182
  %v199 = vunpack.c.l.b16 %v183
  %v200 = vunpack.c.l.b16 %v184
  %v201 = vpack.c.b16 %v194, %v193
  %v202 = vpack.c.b16 %v196, %v195
  %v203 = vpack.c.b16 %v198, %v197
  %v204 = vpack.c.b16 %v200, %v199
  %209 = vmatprep.subr.bf16.mxu0 0
  %210 = vmatpush1.bf16.msra.mxu0 %v201
  %211 = vmatprep.subr.bf16.mxu0 0
  %212 = vmatpush1.bf16.msra.mxu0 %v202
  %213 = vmatprep.subr.bf16.mxu0 0
  %214 = vmatpush1.bf16.msra.mxu0 %v203
  %215 = vmatprep.subr.bf16.mxu0 0
  %216 = vmatpush1.bf16.msra.mxu0 %v204
  %217 = vmatprep.subr.bf16.mxu0 0
  %218 = vmatpush1.bf16.msra.mxu0 0
  %219 = vmatprep.subr.bf16.mxu0 0
  %220 = vmatpush1.bf16.msra.mxu0 0
  %221 = vmatprep.subr.bf16.mxu0 0
  %222 = vmatpush1.bf16.msra.mxu0 0
  %223 = vmatprep.subr.bf16.mxu0 0
  %224 = vmatpush1.bf16.msra.mxu0 0
  %225 = vmatprep.subr.bf16.mxu0 0
  %226 = vmatpush1.bf16.msra.mxu0 0
  %227 = vmatprep.subr.bf16.mxu0 0
  %228 = vmatpush1.bf16.msra.mxu0 0
  %229 = vmatprep.subr.bf16.mxu0 0
  %230 = vmatpush1.bf16.msra.mxu0 0
  %231 = vmatprep.subr.bf16.mxu0 0
  %232 = vmatpush1.bf16.msra.mxu0 0
  %233 = vmatprep.subr.bf16.mxu0 0
  %234 = vmatpush1.bf16.msra.mxu0 0
  %235 = vmatprep.subr.bf16.mxu0 0
  %236 = vmatpush1.bf16.msra.mxu0 0
  %237 = vmatprep.subr.bf16.mxu0 0
  %238 = vmatpush1.bf16.msra.mxu0 0
  %239 = vmatprep.subr.bf16.mxu0 0
  %240 = vmatpush1.bf16.msra.mxu0 0
  %241 = vmatprep.mubr.bf16.mxu0 0
  %242 = vmatmul.mubr.bf16.gmra.mrb[0].mxu0 %v103
  %v243 = vpop.f32.mrb[0].mxu0
  %v244 = vadd.f32 0.0, %v243
  %v245 = vpop.f32.mrb[0].mxu0
  %v246 = vpop.f32.mrb[0].mxu0
  %v247 = vadd.f32 0.0, %v246
  %v248 = vpop.f32.mrb[0].mxu0
  %249 = vmatprep.mubr.bf16.mxu0 0
  %250 = vmatmul.mubr.bf16.gmra.mrb[0].mxu0 %v106
  %v251 = vpop.f32.mrb[0].mxu0
  %v252 = vadd.f32 0.0, %v251
  %v253 = vpop.f32.mrb[0].mxu0
  %v254 = vpop.f32.mrb[0].mxu0
  %v255 = vadd.f32 0.0, %v254
  %v256 = vpop.f32.mrb[0].mxu0
  %257 = vdwg.mxu0
  %s258 = scalar_lea.vmem %s3, 64
  %v259 = vld [vmem:[%s258] sm:$0xf]
  %v260 = vld [vmem:[%s258 + $0x4] sm:$0xf]
  %v261 = vld [vmem:[%s258 + $0x8] sm:$0xf]
  %v262 = vld [vmem:[%s258 + $0xc] sm:$0xf]
  %v263 = vld [vmem:[%s258 + $0x10] sm:$0xf]
  %v264 = vld [vmem:[%s258 + $0x14] sm:$0xf]
  %v265 = vld [vmem:[%s258 + $0x18] sm:$0xf]
  %v266 = vld [vmem:[%s258 + $0x1c] sm:$0xf]
  %v275 = vunpack.c.l.b16 %v259
  %v276 = vunpack.c.l.b16 %v260
  %v277 = vunpack.c.l.b16 %v261
  %v278 = vunpack.c.l.b16 %v262
  %v279 = vunpack.c.l.b16 %v263
  %v280 = vunpack.c.l.b16 %v264
  %v281 = vunpack.c.l.b16 %v265
  %v282 = vunpack.c.l.b16 %v266
  %v283 = vpack.c.b16 %v276, %v275
  %v284 = vpack.c.b16 %v278, %v277
  %v285 = vpack.c.b16 %v280, %v279
  %v286 = vpack.c.b16 %v282, %v281
  %291 = vmatprep.subr.bf16.mxu0 0
  %292 = vmatpush1.bf16.msra.mxu0 %v283
  %293 = vmatprep.subr.bf16.mxu0 0
  %294 = vmatpush1.bf16.msra.mxu0 %v284
  %295 = vmatprep.subr.bf16.mxu0 0
  %296 = vmatpush1.bf16.msra.mxu0 %v285
  %297 = vmatprep.subr.bf16.mxu0 0
  %298 = vmatpush1.bf16.msra.mxu0 %v286
  %299 = vmatprep.subr.bf16.mxu0 0
  %300 = vmatpush1.bf16.msra.mxu0 0
  %301 = vmatprep.subr.bf16.mxu0 0
  %302 = vmatpush1.bf16.msra.mxu0 0
  %303 = vmatprep.subr.bf16.mxu0 0
  %304 = vmatpush1.bf16.msra.mxu0 0
  %305 = vmatprep.subr.bf16.mxu0 0
  %306 = vmatpush1.bf16.msra.mxu0 0
  %307 = vmatprep.subr.bf16.mxu0 0
  %308 = vmatpush1.bf16.msra.mxu0 0
  %309 = vmatprep.subr.bf16.mxu0 0
  %310 = vmatpush1.bf16.msra.mxu0 0
  %311 = vmatprep.subr.bf16.mxu0 0
  %312 = vmatpush1.bf16.msra.mxu0 0
  %313 = vmatprep.subr.bf16.mxu0 0
  %314 = vmatpush1.bf16.msra.mxu0 0
  %315 = vmatprep.subr.bf16.mxu0 0
  %316 = vmatpush1.bf16.msra.mxu0 0
  %317 = vmatprep.subr.bf16.mxu0 0
  %318 = vmatpush1.bf16.msra.mxu0 0
  %319 = vmatprep.subr.bf16.mxu0 0
  %320 = vmatpush1.bf16.msra.mxu0 0
  %321 = vmatprep.subr.bf16.mxu0 0
  %322 = vmatpush1.bf16.msra.mxu0 0
  %323 = vmatprep.mubr.bf16.mxu0 0
  %324 = vmatmul.mubr.bf16.gmra.mrb[0].mxu0 %v103
  %v325 = vpop.f32.mrb[0].mxu0
  %v326 = vadd.f32 0.0, %v325
  %v327 = vpop.f32.mrb[0].mxu0
  %v328 = vpop.f32.mrb[0].mxu0
  %v329 = vadd.f32 0.0, %v328
  %v330 = vpop.f32.mrb[0].mxu0
  %331 = vmatprep.mubr.bf16.mxu0 0
  %332 = vmatmul.mubr.bf16.gmra.mrb[0].mxu0 %v106
  %v333 = vpop.f32.mrb[0].mxu0
  %v334 = vadd.f32 0.0, %v333
  %v335 = vpop.f32.mrb[0].mxu0
  %v336 = vpop.f32.mrb[0].mxu0
  %v337 = vadd.f32 0.0, %v336
  %v338 = vpop.f32.mrb[0].mxu0
  %339 = vdwg.mxu0
  %v340 = vlaneseq
  %v341 = vshrl.u32 %v340, 7
  %v342 = vadd.s32 %v341, 8
  %v343 = vadd.s32 %v341, 16
  %v344 = vadd.s32 %v341, 24
  %vm345 = vcmp.lt.s32.totalorder %v341, 0
  %v346 = vsub.s32 0, %v341
  %v347 = vsel %vm345, %v346, %v341
  %v348 = vshrl.u32 %v347, 4
  %v349 = vand.u32 %v347, 15
  %v350 = vsub.s32 0, %v349
  %v351 = vsel %vm345, %v350, %v349
  %vm352 = vcmp.lt.s32.totalorder %v342, 0
  %v353 = vsub.s32 0, %v342
  %v354 = vsel %vm352, %v353, %v342
  %v355 = vshrl.u32 %v354, 4
  %v356 = vand.u32 %v354, 15
  %v357 = vsub.s32 0, %v356
  %v358 = vsel %vm352, %v357, %v356
  %vm359 = vcmp.lt.s32.totalorder %v343, 0
  %v360 = vsub.s32 0, %v343
  %v361 = vsel %vm359, %v360, %v343
  %v362 = vshrl.u32 %v361, 4
  %v363 = vand.u32 %v361, 15
  %v364 = vsub.s32 0, %v363
  %v365 = vsel %vm359, %v364, %v363
  %vm366 = vcmp.lt.s32.totalorder %v344, 0
  %v367 = vsub.s32 0, %v344
  %v368 = vsel %vm366, %v367, %v344
  %v369 = vshrl.u32 %v368, 4
  %v370 = vand.u32 %v368, 15
  %v371 = vsub.s32 0, %v370
  %v372 = vsel %vm366, %v371, %v370
  %vm373 = vcmp.ne.s32.totalorder %v351, 0
  %vm374 = vcmp.ne.s32.totalorder %v358, 0
  %vm375 = vcmp.ne.s32.totalorder %v365, 0
  %vm376 = vcmp.ne.s32.totalorder %v372, 0
  %vm377 = vcmp.lt.s32.totalorder %v351, 0
  %vm378 = vcmp.lt.s32.totalorder %v358, 0
  %vm379 = vcmp.lt.s32.totalorder %v365, 0
  %vm380 = vcmp.lt.s32.totalorder %v372, 0
  %vm381 = vmand %vm377, %vm373
  %vm382 = vmand %vm378, %vm374
  %vm383 = vmand %vm379, %vm375
  %vm384 = vmand %vm380, %vm376
  %v385 = vadd.s32 %v351, 16
  %v386 = vadd.s32 %v358, 16
  %v387 = vadd.s32 %v365, 16
  %v388 = vadd.s32 %v372, 16
  %v389 = vsel %vm381, %v385, %v351
  %v390 = vsel %vm382, %v386, %v358
  %v391 = vsel %vm383, %v387, %v365
  %v392 = vsel %vm384, %v388, %v372
  %vm393 = vcmp.ne.s32.totalorder %v389, 0
  %vm394 = vcmp.ne.s32.totalorder %v390, 0
  %vm395 = vcmp.ne.s32.totalorder %v391, 0
  %vm396 = vcmp.ne.s32.totalorder %v392, 0
  %v397 = vrot.slane %v244, 7
  %v398 = vrot.slane %v247, 7
  %v399 = vrot.slane %v252, 7
  %v400 = vrot.slane %v255, 7
  %vm401 = vcmp.lt.s32.totalorder %v341, 1
  %v402 = vsel %vm401, %v399, %v400
  %v403 = vsel %vm401, %v398, %v399
  %v404 = vsel %vm401, %v397, %v398
  %v405 = vsel %vm401, %v400, %v397
  %v406 = vsel %vm393, 1, 0
  %v407 = vsel %vm394, 1, 0
  %v408 = vsel %vm395, 1, 0
  %v409 = vsel %vm396, 1, 0
  %vm410 = vcmp.eq.s32.totalorder %v406, 1
  %vm411 = vcmp.eq.s32.totalorder %v407, 1
  %vm412 = vcmp.eq.s32.totalorder %v408, 1
  %vm413 = vcmp.eq.s32.totalorder %v409, 1
  %v414 = vsel %vm410, %v405, 0.0
  %v415 = vsel %vm411, %v404, 0.0
  %v416 = vsel %vm412, %v403, 0.0
  %v417 = vsel %vm413, %v402, 0.0
  %v426 = vunpack.c.l.b16 %v61
  %v427 = vunpack.c.l.b16 %v62
  %v428 = vunpack.c.l.b16 %v63
  %v429 = vunpack.c.l.b16 %v64
  %v430 = vunpack.c.l.b16 %v65
  %v431 = vunpack.c.l.b16 %v66
  %v432 = vunpack.c.l.b16 %v67
  %v433 = vunpack.c.l.b16 %v68
  %v434 = vpack.c.b16 %v427, %v426
  %v435 = vpack.c.b16 %v429, %v428
  %v436 = vpack.c.b16 %v431, %v430
  %v437 = vpack.c.b16 %v433, %v432
  %442 = vmatprep.subr.bf16.mxu0 0
  %443 = vmatpush1.bf16.msra.mxu0 %v434
  %444 = vmatprep.subr.bf16.mxu0 0
  %445 = vmatpush1.bf16.msra.mxu0 %v435
  %446 = vmatprep.subr.bf16.mxu0 0
  %447 = vmatpush1.bf16.msra.mxu0 %v436
  %448 = vmatprep.subr.bf16.mxu0 0
  %449 = vmatpush1.bf16.msra.mxu0 %v437
  %450 = vmatprep.subr.bf16.mxu0 0
  %451 = vmatpush1.bf16.msra.mxu0 0
  %452 = vmatprep.subr.bf16.mxu0 0
  %453 = vmatpush1.bf16.msra.mxu0 0
  %454 = vmatprep.subr.bf16.mxu0 0
  %455 = vmatpush1.bf16.msra.mxu0 0
  %456 = vmatprep.subr.bf16.mxu0 0
  %457 = vmatpush1.bf16.msra.mxu0 0
  %458 = vmatprep.subr.bf16.mxu0 0
  %459 = vmatpush1.bf16.msra.mxu0 0
  %460 = vmatprep.subr.bf16.mxu0 0
  %461 = vmatpush1.bf16.msra.mxu0 0
  %462 = vmatprep.subr.bf16.mxu0 0
  %463 = vmatpush1.bf16.msra.mxu0 0
  %464 = vmatprep.subr.bf16.mxu0 0
  %465 = vmatpush1.bf16.msra.mxu0 0
  %466 = vmatprep.subr.bf16.mxu0 0
  %467 = vmatpush1.bf16.msra.mxu0 0
  %468 = vmatprep.subr.bf16.mxu0 0
  %469 = vmatpush1.bf16.msra.mxu0 0
  %470 = vmatprep.subr.bf16.mxu0 0
  %471 = vmatpush1.bf16.msra.mxu0 0
  %472 = vmatprep.subr.bf16.mxu0 0
  %473 = vmatpush1.bf16.msra.mxu0 0
  %474 = vmatprep.mubr.bf16.mxu0 0
  %475 = vmatmul.mubr.bf16.gmra.mrb[0].mxu0 %v103
  %v476 = vpop.f32.mrb[0].mxu0
  %v477 = vadd.f32 %v414, %v476
  %v478 = vpop.f32.mrb[0].mxu0
  %v479 = vpop.f32.mrb[0].mxu0
  %v480 = vadd.f32 %v415, %v479
  %v481 = vpop.f32.mrb[0].mxu0
  %482 = vmatprep.mubr.bf16.mxu0 0
  %483 = vmatmul.mubr.bf16.gmra.mrb[0].mxu0 %v106
  %v484 = vpop.f32.mrb[0].mxu0
  %v485 = vadd.f32 %v416, %v484
  %v486 = vpop.f32.mrb[0].mxu0
  %v487 = vpop.f32.mrb[0].mxu0
  %v488 = vadd.f32 %v417, %v487
  %v489 = vpop.f32.mrb[0].mxu0
  %490 = vdwg.mxu0
  %vm491 = vcmp.ne.s32.totalorder %v389, 15
  %vm492 = vcmp.ne.s32.totalorder %v390, 15
  %vm493 = vcmp.ne.s32.totalorder %v391, 15
  %vm494 = vcmp.ne.s32.totalorder %v392, 15
  %v495 = vrot.slane %v326, 1
  %v496 = vrot.slane %v329, 1
  %v497 = vrot.slane %v334, 1
  %v498 = vrot.slane %v337, 1
  %vm499 = vcmp.lt.s32.totalorder %v341, 7
  %v500 = vsel %vm499, %v497, %v498
  %v501 = vsel %vm499, %v496, %v497
  %v502 = vsel %vm499, %v495, %v496
  %v503 = vsel %vm499, %v498, %v495
  %v504 = vsel %vm491, 1, 0
  %v505 = vsel %vm492, 1, 0
  %v506 = vsel %vm493, 1, 0
  %v507 = vsel %vm494, 1, 0
  %vm508 = vcmp.eq.s32.totalorder %v504, 1
  %vm509 = vcmp.eq.s32.totalorder %v505, 1
  %vm510 = vcmp.eq.s32.totalorder %v506, 1
  %vm511 = vcmp.eq.s32.totalorder %v507, 1
  %v512 = vsel %vm508, %v502, 0.0
  %v513 = vsel %vm509, %v501, 0.0
  %v514 = vsel %vm510, %v500, 0.0
  %v515 = vsel %vm511, %v503, 0.0
  %v516 = vadd.f32 %v477, %v512
  %v517 = vadd.f32 %v480, %v513
  %v518 = vadd.f32 %v485, %v514
  %v519 = vadd.f32 %v488, %v515
  %v520 = vpack.c.bf16 %v517, %v516
  %v521 = vpack.c.bf16 %v519, %v518
  %v524 = vunpack.c.l.b16 %v520
  %v525 = vunpack.c.h.b16 %v520
  %v526 = vunpack.c.l.b16 %v521
  %v527 = vunpack.c.h.b16 %v521
  %v528 = vpack.c.b16 %v524, %v524
  %v529 = vpack.c.b16 %v525, %v525
  %v530 = vpack.c.b16 %v526, %v526
  %v531 = vpack.c.b16 %v527, %v527
  %536 = vst [vmem:[%s6] sm:$0xf] %v528
  %537 = vst [vmem:[%s6 + $0x4] sm:$0xf] %v529
  %538 = vst [vmem:[%s6 + $0x8] sm:$0xf] %v530
  %539 = vst [vmem:[%s6 + $0xc] sm:$0xf] %v531
  %v540 = vmul.f32 %v516, %v516
  %v541 = vmul.f32 %v517, %v517
  %v542 = vmul.f32 %v518, %v518
  %v543 = vmul.f32 %v519, %v519
  %v544 = vld [vmem:[%s5] sm:$0xff]
  %v545 = vld [vmem:[%s5 + $0x8] sm:$0xff]
  %v546 = vld [vmem:[%s5 + $0x10] sm:$0xff]
  %v547 = vld [vmem:[%s5 + $0x18] sm:$0xff]
  %v548 = vld [vmem:[%s5 + $0x20] sm:$0xff]
  %v549 = vld [vmem:[%s5 + $0x28] sm:$0xff]
  %v550 = vld [vmem:[%s5 + $0x30] sm:$0xff]
  %v551 = vld [vmem:[%s5 + $0x38] sm:$0xff]
  %v552 = vld [vmem:[%s5 + $0x40] sm:$0xff]
  %v553 = vld [vmem:[%s5 + $0x48] sm:$0xff]
  %v554 = vld [vmem:[%s5 + $0x50] sm:$0xff]
  %v555 = vld [vmem:[%s5 + $0x58] sm:$0xff]
  %v556 = vld [vmem:[%s5 + $0x60] sm:$0xff]
  %v557 = vld [vmem:[%s5 + $0x68] sm:$0xff]
  %v558 = vld [vmem:[%s5 + $0x70] sm:$0xff]
  %v559 = vld [vmem:[%s5 + $0x78] sm:$0xff]
  %560 = vmatprep.subr.mxu0 0.0
  %561 = vmatpush1.msra.mxu0 %v544
  %562 = vmatprep.subr.mxu0 0.0
  %563 = vmatpush1.msra.mxu0 %v545
  %564 = vmatprep.subr.mxu0 0.0
  %565 = vmatpush1.msra.mxu0 %v546
  %566 = vmatprep.subr.mxu0 0.0
  %567 = vmatpush1.msra.mxu0 %v547
  %568 = vmatprep.subr.mxu0 0.0
  %569 = vmatpush1.msra.mxu0 %v548
  %570 = vmatprep.subr.mxu0 0.0
  %571 = vmatpush1.msra.mxu0 %v549
  %572 = vmatprep.subr.mxu0 0.0
  %573 = vmatpush1.msra.mxu0 %v550
  %574 = vmatprep.subr.mxu0 0.0
  %575 = vmatpush1.msra.mxu0 %v551
  %576 = vmatprep.subr.mxu0 0.0
  %577 = vmatpush1.msra.mxu0 %v552
  %578 = vmatprep.subr.mxu0 0.0
  %579 = vmatpush1.msra.mxu0 %v553
  %580 = vmatprep.subr.mxu0 0.0
  %581 = vmatpush1.msra.mxu0 %v554
  %582 = vmatprep.subr.mxu0 0.0
  %583 = vmatpush1.msra.mxu0 %v555
  %584 = vmatprep.subr.mxu0 0.0
  %585 = vmatpush1.msra.mxu0 %v556
  %586 = vmatprep.subr.mxu0 0.0
  %587 = vmatpush1.msra.mxu0 %v557
  %588 = vmatprep.subr.mxu0 0.0
  %589 = vmatpush1.msra.mxu0 %v558
  %590 = vmatprep.subr.mxu0 0.0
  %591 = vmatpush1.msra.mxu0 %v559
  %592 = vmatprep.subr.mxu0 0.0
  %593 = vmatpush1.msra.mxu0 0.0
  %594 = vmatprep.subr.mxu0 0.0
  %595 = vmatpush1.msra.mxu0 0.0
  %596 = vmatprep.subr.mxu0 0.0
  %597 = vmatpush1.msra.mxu0 0.0
  %598 = vmatprep.subr.mxu0 0.0
  %599 = vmatpush1.msra.mxu0 0.0
  %600 = vmatprep.subr.mxu0 0.0
  %601 = vmatpush1.msra.mxu0 0.0
  %602 = vmatprep.subr.mxu0 0.0
  %603 = vmatpush1.msra.mxu0 0.0
  %604 = vmatprep.subr.mxu0 0.0
  %605 = vmatpush1.msra.mxu0 0.0
  %606 = vmatprep.subr.mxu0 0.0
  %607 = vmatpush1.msra.mxu0 0.0
  %608 = vmatprep.subr.mxu0 0.0
  %609 = vmatpush1.msra.mxu0 0.0
  %610 = vmatprep.subr.mxu0 0.0
  %611 = vmatpush1.msra.mxu0 0.0
  %612 = vmatprep.subr.mxu0 0.0
  %613 = vmatpush1.msra.mxu0 0.0
  %614 = vmatprep.subr.mxu0 0.0
  %615 = vmatpush1.msra.mxu0 0.0
  %616 = vmatprep.subr.mxu0 0.0
  %617 = vmatpush1.msra.mxu0 0.0
  %618 = vmatprep.subr.mxu0 0.0
  %619 = vmatpush1.msra.mxu0 0.0
  %620 = vmatprep.subr.mxu0 0.0
  %621 = vmatpush1.msra.mxu0 0.0
  %622 = vmatprep.subr.mxu0 0.0
  %623 = vmatpush1.msra.mxu0 0.0
  %624 = vmatprep.mubr.f32.mxu0 0.0
  %625 = vmatmul.mubr.f32.gmra.mrb[0].mxu0 %v516
  %v626 = vpop.f32.mrb[0].mxu0
  %v627 = vadd.f32 0.0, %v626
  %v628 = vpop.f32.mrb[0].mxu0
  %629 = vmatprep.mubr.f32.mxu0 0.0
  %630 = vmatmul.mubr.f32.gmra.mrb[0].mxu0 %v517
  %v631 = vpop.f32.mrb[0].mxu0
  %v632 = vadd.f32 0.0, %v631
  %v633 = vpop.f32.mrb[0].mxu0
  %634 = vmatprep.mubr.f32.mxu0 0.0
  %635 = vmatmul.mubr.f32.gmra.mrb[0].mxu0 %v518
  %v636 = vpop.f32.mrb[0].mxu0
  %v637 = vadd.f32 0.0, %v636
  %v638 = vpop.f32.mrb[0].mxu0
  %639 = vmatprep.mubr.f32.mxu0 0.0
  %640 = vmatmul.mubr.f32.gmra.mrb[0].mxu0 %v519
  %v641 = vpop.f32.mrb[0].mxu0
  %v642 = vadd.f32 0.0, %v641
  %v643 = vpop.f32.mrb[0].mxu0
  %644 = vmatprep.mubr.f32.mxu0 0.0
  %645 = vmatmul.mubr.f32.gmra.mrb[0].mxu0 %v540
  %v646 = vpop.f32.mrb[0].mxu0
  %v647 = vadd.f32 0.0, %v646
  %v648 = vpop.f32.mrb[0].mxu0
  %649 = vmatprep.mubr.f32.mxu0 0.0
  %650 = vmatmul.mubr.f32.gmra.mrb[0].mxu0 %v541
  %v651 = vpop.f32.mrb[0].mxu0
  %v652 = vadd.f32 0.0, %v651
  %v653 = vpop.f32.mrb[0].mxu0
  %654 = vmatprep.mubr.f32.mxu0 0.0
  %655 = vmatmul.mubr.f32.gmra.mrb[0].mxu0 %v542
  %v656 = vpop.f32.mrb[0].mxu0
  %v657 = vadd.f32 0.0, %v656
  %v658 = vpop.f32.mrb[0].mxu0
  %659 = vmatprep.mubr.f32.mxu0 0.0
  %660 = vmatmul.mubr.f32.gmra.mrb[0].mxu0 %v543
  %v661 = vpop.f32.mrb[0].mxu0
  %v662 = vadd.f32 0.0, %v661
  %v663 = vpop.f32.mrb[0].mxu0
  %664 = vdwg.mxu0
  %vm665 = vcmask 64512
  %v666 = vsel %vm665, %v627, 0.0
  %v667 = vsel %vm665, %v632, 0.0
  %v668 = vadd.f32 %v666, %v667
  %v669 = vsel %vm665, %v637, 0.0
  %v670 = vadd.f32 %v668, %v669
  %v671 = vsel %vm665, %v642, 0.0
  %v672 = vadd.f32 %v670, %v671
  %v673 = vrot.slane %v672, 4
  %v674 = vadd.f32 %v672, %v673
  %v675 = vrot.slane %v674, 2
  %v676 = vadd.f32 %v674, %v675
  %v677 = vrot.slane %v676, 1
  %v678 = vadd.f32 %v676, %v677
  %vm679 = vcmask 57344
  %680 = vst.msk [vmem:[%s8] sm:$0x1] %vm679, %v678
  %v681 = vsel %vm665, %v647, 0.0
  %v682 = vsel %vm665, %v652, 0.0
  %v683 = vadd.f32 %v681, %v682
  %v684 = vsel %vm665, %v657, 0.0
  %v685 = vadd.f32 %v683, %v684
  %v686 = vsel %vm665, %v662, 0.0
  %v687 = vadd.f32 %v685, %v686
  %v688 = vrot.slane %v687, 4
  %v689 = vadd.f32 %v687, %v688
  %v690 = vrot.slane %v689, 2
  %v691 = vadd.f32 %v689, %v690
  %v692 = vrot.slane %v691, 1
  %v693 = vadd.f32 %v691, %v692
  %694 = vst.msk [vmem:[%s9] sm:$0x1] %vm679, %v693
  // Predicated region
  $region26: #{_preact_block_jit.2} parent=0 // pred_check
    _
  $region27: #{_preact_block_jit.2} parent=0 // pred_check_branch
    %696 = sbr.rel (0) target = $region29
  $region28: #{_preact_block_jit.2} parent=0 // pred_region
    _
  $region29: #{_preact_block_jit.2} parent=0 // pred_fallthru
    _
  // Predicated region
  $region30: #{_preact_block_jit.2} parent=0 // pred_check
    _
  $region31: #{_preact_block_jit.2} parent=0 // pred_check_branch
    %698 = sbr.rel (0) target = $region33
  $region32: #{_preact_block_jit.2} parent=0 // pred_region
    _
  $region33: #{_preact_block_jit.2} parent=0 // pred_fallthru
    _
  // Predicated region
  $region34: #{_preact_block_jit.2} parent=0 // pred_check
    _
  $region35: #{_preact_block_jit.2} parent=0 // pred_check_branch
    %700 = sbr.rel (0) target = $region37
  $region36: #{_preact_block_jit.2} parent=0 // pred_region
    _
  $region37: #{_preact_block_jit.2} parent=0 // pred_fallthru
    _
  // Predicated region
  $region38: #{_preact_block_jit.2} parent=0 // pred_check
    _
  $region39: #{_preact_block_jit.2} parent=0 // pred_check_branch
    %702 = sbr.rel (0) target = $region41
  $region40: #{_preact_block_jit.2} parent=0 // pred_region
    _
  $region41: #{_preact_block_jit.2} parent=0 // pred_fallthru
    _
  // Predicated region
  $region42: #{_preact_block_jit.2} parent=0 // pred_check
    _
  $region43: #{_preact_block_jit.2} parent=0 // pred_check_branch
    %704 = sbr.rel (0) target = $region45
  $region44: #{_preact_block_jit.2} parent=0 // pred_region
    _
  $region45: #{_preact_block_jit.2} parent=0 // pred_fallthru
    _
  // Predicated region
  $region46: #{_preact_block_jit.2} parent=0 // pred_check
    _
  $region47: #{_preact_block_jit.2} parent=0 // pred_check_branch
    %706 = sbr.rel (0) target = $region49
  $region48: #{_preact_block_jit.2} parent=0 // pred_region
    _
  $region49: #{_preact_block_jit.2} parent=0 // pred_fallthru
    _
  // Predicated region
  $region50: #{_preact_block_jit.2} parent=0 // pred_check
    _
  $region51: #{_preact_block_jit.2} parent=0 // pred_check_branch
    %708 = sbr.rel (0) target = $region53
  $region52: #{_preact_block_jit.2} parent=0 // pred_region
    _
  $region53: #{_preact_block_jit.2} parent=0 // pred_fallthru
    _
  // Predicated region
  $region54: #{_preact_block_jit.2} parent=0 // pred_check
    _
  $region55: #{_preact_block_jit.2} parent=0 // pred_check_branch
    %710 = sbr.rel (0) target = $region57
  $region56: #{_preact_block_jit.2} parent=0 // pred_region
    _
  $region57: #{_preact_block_jit.2} parent=0 // pred_fallthru
    _

</llo_original>
